<compile_context>
chip_gen: v7x
topology: tpu7x:2x2x1
jax: 0.10.0
libtpu: 0.0.40
codegen_flags: <defaults>
</compile_context>

<pallas_src>
import functools
import math

import jax
import jax.numpy as jnp
from jax.experimental import pallas as pl
from jax.experimental.pallas import tpu as pltpu


# --------------------------------------------------------------------------------------
# Per-generation VMEM budget / tiling helpers.
# --------------------------------------------------------------------------------------
@functools.lru_cache(maxsize=None)
def _vmem_budget_bytes():
    phys = None
    try:
        phys = int(pltpu.get_tpu_info().vmem_capacity_bytes)
    except Exception:
        phys = None
    if not phys:
        try:
            kind = jax.devices()[0].device_kind.lower()
            phys = (64 if "v7" in kind else 128) * 1024 * 1024
        except Exception:
            phys = 64 * 1024 * 1024
    # Leave ~25% headroom for compiler-internal scratch:
    # 128 MiB -> 96 MiB (v5e/v6e), 64 MiB -> 48 MiB per TensorCore (v7x).
    return (phys * 3) // 4


def _round_up(n, m):
    return (n + m - 1) // m * m


def _derive_row_cap(budget, weight_bytes, per_row_bytes, lo, hi):
    """Largest row-tile cap that keeps (double-buffered weights + row blocks) in budget."""
    avail = budget - 2 * weight_bytes          # constant-index weight blocks are double-buffered
    cap = lo if avail <= 0 else min(hi, max(lo, avail // max(per_row_bytes, 1)))
    return max(8, cap - cap % 8)


def _choose_row_tile(n, cap):
    """Row tile (multiple of 8, <= cap).  Rows are padded to a multiple of the tile."""
    cap = max(8, cap - cap % 8)
    if n <= cap:
        return _round_up(n, 8)
    n_pad = _round_up(n, 8)
    for t in range(cap, 7, -8):
        if n_pad % t == 0:
            return t
    return cap                                  # caller pads rows up to a multiple of cap


def _pad_rows(x, multiple):
    n = x.shape[0]
    pad = _round_up(n, multiple) - n
    if pad:
        x = jnp.pad(x, ((0, pad),) + ((0, 0),) * (x.ndim - 1))
    return x


def _const_index_map(ndim):
    return lambda i: (0,) * ndim


def _layernorm(x, gamma, beta, eps=1e-5):
    mean = jnp.mean(x, axis=-1, keepdims=True)
    var = jnp.mean((x - mean) ** 2, axis=-1, keepdims=True)
    return (x - mean) * jax.lax.rsqrt(var + eps) * gamma + beta


# --------------------------------------------------------------------------------------
# Kernel (a): fused QKV projection over flat [B*L, D] rows.
# --------------------------------------------------------------------------------------
def _qkv_proj_kernel(x_ref, w_ref, b_ref, qkv_ref):
    x = x_ref[...].astype(jnp.bfloat16)                       # bf16 MXU operand
    acc = jnp.dot(x, w_ref[...], preferred_element_type=jnp.float32)
    qkv_ref[...] = (acc + b_ref[...]).astype(qkv_ref.dtype)


def _qkv_proj(x_flat, w, b):
    n, d = x_flat.shape
    d3 = w.shape[1]
    budget = _vmem_budget_bytes()
    # Per row: f32 input + bf16 output (double-buffered) + f32 accumulator.
    per_row = 2 * (4 * d + 2 * d3) + 4 * d3
    weight_bytes = int(w.size) * w.dtype.itemsize + int(b.size) * b.dtype.itemsize
    cap = _derive_row_cap(budget, weight_bytes, per_row, lo=64, hi=1024)
    tm = _choose_row_tile(n, cap)
    xp = _pad_rows(x_flat, tm)
    n_pad = xp.shape[0]
    out = pl.pallas_call(
        _qkv_proj_kernel,
        out_shape=jax.ShapeDtypeStruct((n_pad, d3), jnp.bfloat16),
        grid=(n_pad // tm,),
        in_specs=[
            pl.BlockSpec((tm, d), lambda i: (i, 0)),
            pl.BlockSpec((d, d3), _const_index_map(2)),
            pl.BlockSpec((1, d3), _const_index_map(2)),
        ],
        out_specs=pl.BlockSpec((tm, d3), lambda i: (i, 0)),
        compiler_params=pltpu.CompilerParams(
            dimension_semantics=("parallel",), vmem_limit_bytes=budget),
    )(xp, w, b)
    return out[:n]


# --------------------------------------------------------------------------------------
# Kernel (b): full self-attention, one batch element per grid step, all heads in-kernel.
# Reads the flat fused QKV block directly and writes ctx as one lane-dense [L, D] slab;
# attention maps are written per-head as full [L, L] slabs in bf16.
# --------------------------------------------------------------------------------------
def _attention_kernel(scale, n_heads, qkv_ref, ctx_ref, attn_ref):
    d3 = qkv_ref.shape[-1]
    d = d3 // 3
    e = d // n_heads
    qkv = qkv_ref[...]                                        # [L, 3D] bf16
    ctx_heads = []
    for h in range(n_heads):                                  # unrolled (static) head loop
        q = qkv[:, h * e:(h + 1) * e]
        k = qkv[:, d + h * e:d + (h + 1) * e]
        v = qkv[:, 2 * d + h * e:2 * d + (h + 1) * e]
        s = jnp.dot(q, k.T, preferred_element_type=jnp.float32) * scale
        s = s - jnp.max(s, axis=-1, keepdims=True)            # f32 softmax stats
        p = jnp.exp(s)
        a = p * pl.reciprocal(jnp.sum(p, axis=-1, keepdims=True), approx=True)
        attn_ref[h] = a.astype(attn_ref.dtype)                # full-width [L, L] store
        ctx_heads.append(jnp.dot(a.astype(v.dtype), v,
                                 preferred_element_type=jnp.float32))
    ctx_ref[...] = jnp.concatenate(ctx_heads, axis=-1).astype(ctx_ref.dtype)


def _attention(qkv, n_heads):
    b, L, d3 = qkv.shape
    d = d3 // 3
    e = d // n_heads
    scale = 1.0 / math.sqrt(e)                                # Informer FullAttention scale
    kernel = functools.partial(_attention_kernel, scale, n_heads)
    # TODO(synk): for long sequences on v7x (64 MiB VMEM) tile the KV axis with an
    # online-softmax (flash-style) variant; the full [H, L, L] attention-map output
    # required by output_attention keeps this form O(L^2) in VMEM per grid step.
    return pl.pallas_call(
        kernel,
        out_shape=(jax.ShapeDtypeStruct((b, L, d), jnp.bfloat16),
                   jax.ShapeDtypeStruct((b, n_heads, L, L), jnp.bfloat16)),
        grid=(b,),
        in_specs=[pl.BlockSpec((None, L, d3), lambda i: (i, 0, 0))],
        out_specs=(pl.BlockSpec((None, L, d), lambda i: (i, 0, 0)),
                   pl.BlockSpec((None, n_heads, L, L), lambda i: (i, 0, 0, 0))),
        compiler_params=pltpu.CompilerParams(
            dimension_semantics=("parallel",), vmem_limit_bytes=_vmem_budget_bytes()),
    )(qkv)


# --------------------------------------------------------------------------------------
# Kernel (c): output projection + residual + LN1 + position-wise FFN + LN2
#             over flat [B*L, D] row tiles.
# --------------------------------------------------------------------------------------
def _out_ffn_kernel(x_ref, ctx_ref, wo_ref, bo_ref, w1_ref, b1_ref,
                    w2_ref, b2_ref, g1_ref, be1_ref, g2_ref, be2_ref, out_ref):
    x = x_ref[...]                                            # [TM, D] f32 residual
    ctx = ctx_ref[...]                                        # [TM, D] bf16 attention ctx
    new_x = jnp.dot(ctx, wo_ref[...], preferred_element_type=jnp.float32) + bo_ref[...]
    y0 = _layernorm(x + new_x, g1_ref[...], be1_ref[...])     # f32 statistics
    h = jnp.dot(y0.astype(jnp.bfloat16), w1_ref[...],
                preferred_element_type=jnp.float32) + b1_ref[...]
    h = jnp.maximum(h, 0.0).astype(jnp.bfloat16)              # relu
    y = jnp.dot(h, w2_ref[...], preferred_element_type=jnp.float32) + b2_ref[...]
    out_ref[...] = _layernorm(y0 + y, g2_ref[...], be2_ref[...]).astype(out_ref.dtype)


_FFN_WEIGHT_ORDER = ("wo", "bo", "w1", "b1", "w2", "b2", "g1", "be1", "g2", "be2")


def _out_ffn(x_flat, ctx, params):
    n, d = x_flat.shape
    d_ff = params["w1"].shape[1]
    budget = _vmem_budget_bytes()
    weights = [params[k] for k in _FFN_WEIGHT_ORDER]
    weight_bytes = sum(int(w.size) * w.dtype.itemsize for w in weights)
    # Per row: double-buffered x/ctx/out blocks + live f32 intermediates (new_x/y0/y)
    # + the [tm, d_ff] hidden activation.
    per_row = 2 * (4 * d + 2 * d + 4 * d) + 16 * d + 6 * d_ff
    # hi=256: keep live intermediates bounded so the kernel stays MXU-bound (spill control).
    cap = _derive_row_cap(budget, weight_bytes, per_row, lo=64, hi=256)
    tm = _choose_row_tile(n, cap)
    xp, ctxp = _pad_rows(x_flat, tm), _pad_rows(ctx, tm)
    n_pad = xp.shape[0]
    # Weight blocks have constant index maps -> stay resident across grid steps.
    w_specs = [pl.BlockSpec(w.shape, _const_index_map(w.ndim)) for w in weights]
    out = pl.pallas_call(
        _out_ffn_kernel,
        out_shape=jax.ShapeDtypeStruct((n_pad, d), jnp.float32),
        grid=(n_pad // tm,),
        in_specs=[pl.BlockSpec((tm, d), lambda i: (i, 0)),
                  pl.BlockSpec((tm, d), lambda i: (i, 0))] + w_specs,
        out_specs=pl.BlockSpec((tm, d), lambda i: (i, 0)),
        compiler_params=pltpu.CompilerParams(
            dimension_semantics=("parallel",), vmem_limit_bytes=budget),
    )(xp, ctxp, *weights)
    return out[:n]


# --------------------------------------------------------------------------------------
# Encoder layer / stack wrappers.
# --------------------------------------------------------------------------------------
@functools.partial(jax.jit, static_argnums=(2,))
def encoder_layer_forward(x, params, n_heads):
    """x: [B, L, D] f32 -> (out [B, L, D] f32, attn [B, H, L, L] bf16)."""
    B, L, D = x.shape
    x_flat = x.reshape(B * L, D)

    # (a) fused QKV projection: one [B*L, D] @ [D, 3D] MXU matmul.
    qkv = _qkv_proj(x_flat, params["wqkv"], params["bqkv"])          # bf16 [B*L, 3D]

    # (b) attention reads the flat QKV directly (contiguous reshape only — no HBM
    #     transpose round-trips) and writes ctx back in [B, L, D] layout.
    ctx, attn = _attention(qkv.reshape(B, L, 3 * D), n_heads)

    # (c) output projection + residual + LN1 + FFN + LN2 over flat rows.
    out = _out_ffn(x_flat, ctx.reshape(B * L, D), params)            # f32 [B*L, D]
    return out.reshape(B, L, D), attn


def encoder_stack_forward(x, encoders_params, inp_lens, n_heads, attn_mask=None):
    """Mirror of EncoderStack.forward: slice, encode, concat along the seq dim."""
    # Informer encoder self-attention uses mask_flag=False; refuse a mask loudly
    # rather than silently dropping it.
    assert attn_mask is None, "attn_mask is not supported (Informer encoder uses mask_flag=False)"
    x_stack, attns = [], []
    for i_len, params in zip(inp_lens, encoders_params):
        inp_len = x.shape[1] // 2 ** i_len
        x_s, attn = encoder_layer_forward(x[:, -inp_len:, :], params, n_heads)
        x_stack.append(x_s)
        attns.append(attn)
    return jnp.concatenate(x_stack, axis=-2), attns


# --------------------------------------------------------------------------------------
# Parameter init and pure-JAX reference (for correctness checking).
# --------------------------------------------------------------------------------------
def init_encoder_params(key, d_model, d_ff):
    ks = jax.random.split(key, 12)

    def lin(k, fi, fo):
        w = jax.random.normal(k, (fi, fo), jnp.float32) / jnp.sqrt(jnp.float32(fi))
        return w.astype(jnp.bfloat16)        # MXU operands stored in bf16

    def bias(k, fo, scale=0.02):
        return scale * jax.random.normal(k, (1, fo), jnp.float32)

    wq, wk, wv = lin(ks[0], d_model, d_model), lin(ks[1], d_model, d_model), lin(ks[2], d_model, d_model)
    bq, bk, bv = bias(ks[6], d_model), bias(ks[7], d_model), bias(ks[8], d_model)
    return {
        "wqkv": jnp.concatenate([wq, wk, wv], axis=1),   # [D, 3D] bf16 (fused QKV)
        "bqkv": jnp.concatenate([bq, bk, bv], axis=1),   # [1, 3D] f32
        "wo": lin(ks[3], d_model, d_model), "bo": bias(ks[9], d_model),
        "w1": lin(ks[4], d_model, d_ff),    "b1": bias(ks[10], d_ff),
        "w2": lin(ks[5], d_ff, d_model),    "b2": bias(ks[11], d_model),
        "g1": jnp.ones((1, d_model), jnp.float32),  "be1": jnp.zeros((1, d_model), jnp.float32),
        "g2": jnp.ones((1, d_model), jnp.float32),  "be2": jnp.zeros((1, d_model), jnp.float32),
    }


def _reference_layer(x, p, n_heads):
    B, L, D = x.shape
    H, E = n_heads, D // n_heads
    f = lambda a: a.astype(jnp.float32)
    xf = x.reshape(B * L, D)
    qkv = xf @ f(p["wqkv"]) + p["bqkv"]

    def sh(i):
        return qkv[:, i * D:(i + 1) * D].reshape(B, L, H, E).transpose(0, 2, 1, 3)

    q, k, v = sh(0), sh(1), sh(2)
    s = jnp.einsum("bhle,bhme->bhlm", q, k) / jnp.sqrt(jnp.float32(E))
    a = jax.nn.softmax(s, axis=-1)
    ctx = jnp.einsum("bhlm,bhme->bhle", a, v).transpose(0, 2, 1, 3).reshape(B * L, D)
    new_x = ctx @ f(p["wo"]) + p["bo"]
    y0 = _layernorm(xf + new_x, p["g1"], p["be1"])
    h = jnp.maximum(y0 @ f(p["w1"]) + p["b1"], 0.0)
    y = h @ f(p["w2"]) + p["b2"]
    out = _layernorm(y0 + y, p["g2"], p["be2"])
    return out.reshape(B, L, D), a


def _reference_stack(x, encoders_params, inp_lens, n_heads):
    outs, attns = [], []
    for i_len, p in zip(inp_lens, encoders_params):
        inp_len = x.shape[1] // 2 ** i_len
        o, a = _reference_layer(x[:, -inp_len:, :], p, n_heads)
        outs.append(o)
        attns.append(a)
    return jnp.concatenate(outs, axis=-2), attns


if __name__ == "__main__":
    B, L, D = 2, 8, 32          # batch, seq_len, d_model
    H, D_FF = 4, 64             # n_heads, feed-forward width
    INP_LENS = [0, 1]           # encoder 0 sees last L, encoder 1 sees last L//2

    root = jax.random.PRNGKey(0)
    kx, kp = jax.random.split(root)
    x = jax.random.normal(kx, (B, L, D), jnp.float32)

    enc_keys = jax.random.split(kp, len(INP_LENS))
    encoders_params = [init_encoder_params(k, D, D_FF) for k in enc_keys]

    out, attns = encoder_stack_forward(x, encoders_params, INP_LENS, H)
    out = jax.block_until_ready(out)
    attns = [jax.block_until_ready(a) for a in attns]

    expected_L = sum(L // 2 ** i for i in INP_LENS)
    assert out.shape == (B, expected_L, D), out.shape
    assert attns[0].shape == (B, H, L, L), attns[0].shape
    assert attns[1].shape == (B, H, L // 2, L // 2), attns[1].shape
    assert bool(jnp.all(jnp.isfinite(out)))

    # Cross-check against a pure-JAX f32 reference (tolerances cover the intentional
    # bf16 matmul operands / attention maps and approx-reciprocal softmax normalization).
    ref_out, ref_attns = _reference_stack(x, encoders_params, INP_LENS, H)
    assert bool(jnp.allclose(out, ref_out, atol=0.12, rtol=0.1)), \
        float(jnp.max(jnp.abs(out - ref_out)))
    for a, ra in zip(attns, ref_attns):
        af = a.astype(jnp.float32)
        assert bool(jnp.allclose(af, ra, atol=0.05)), float(jnp.max(jnp.abs(af - ra)))

    print("KERNEL_OK")
</pallas_src>

<mosaic_0001>
module attributes {stable_mosaic.version = 11 : i64} {
  func.func @_qkv_proj_kernel(%arg0: i32, %arg1: memref<16x32xf32, #tpu.memory_space<vmem>>, %arg2: memref<32x96xbf16, #tpu.memory_space<vmem>>, %arg3: memref<1x96xf32, #tpu.memory_space<vmem>>, %arg4: memref<16x96xbf16, #tpu.memory_space<vmem>>) attributes {dimension_semantics = [#tpu.dimension_semantics<parallel>], iteration_bounds = array<i64: 1>, scalar_prefetch = 0 : i64, scratch_operands = 0 : i64, tpu.core_type = #tpu.core_type<tc>, window_params = [{transform_indices = @transform_0, window_bounds = array<i64: 16, 32>}, {pipeline_mode = #tpu.pipeline_mode<synchronous>, transform_indices = @transform_1, window_bounds = array<i64: 32, 96>}, {pipeline_mode = #tpu.pipeline_mode<synchronous>, transform_indices = @transform_2, window_bounds = array<i64: 1, 96>}, {transform_indices = @transform_3, window_bounds = array<i64: 16, 96>}]} {
    %c0 = arith.constant 0 : index
    %c0_0 = arith.constant 0 : index
    %0 = vector.load %arg1[%c0, %c0_0] : memref<16x32xf32, #tpu.memory_space<vmem>>, vector<16x32xf32>
    %1 = arith.truncf %0 : vector<16x32xf32> to vector<16x32xbf16>
    %c0_1 = arith.constant 0 : index
    %c0_2 = arith.constant 0 : index
    %2 = vector.load %arg2[%c0_1, %c0_2] : memref<32x96xbf16, #tpu.memory_space<vmem>>, vector<32x96xbf16>
    %cst = arith.constant dense<0.000000e+00> : vector<16x96xf32>
    %3 = tpu.matmul %1, %2, %cst {dimension_numbers = #tpu.dot_dimension_numbers<[1], [0], [0], [1], [0, 0, 1, 1], [], []>} : vector<16x32xbf16>, vector<32x96xbf16>, vector<16x96xf32> -> vector<16x96xf32>
    %c0_3 = arith.constant 0 : index
    %c0_4 = arith.constant 0 : index
    %4 = vector.load %arg3[%c0_3, %c0_4] : memref<1x96xf32, #tpu.memory_space<vmem>>, vector<1x96xf32>
    %5 = vector.broadcast %4 : vector<1x96xf32> to vector<16x96xf32>
    %6 = arith.addf %3, %5 : vector<16x96xf32>
    %7 = arith.truncf %6 : vector<16x96xf32> to vector<16x96xbf16>
    %c0_5 = arith.constant 0 : index
    %c0_6 = arith.constant 0 : index
    %8 = vector.load %arg4[%c0_5, %c0_6] : memref<16x96xbf16, #tpu.memory_space<vmem>>, vector<16x96xbf16>
    tpu.vector_store %arg4[%c0_5, %c0_6], %7 {strides = array<i32>} : memref<16x96xbf16, #tpu.memory_space<vmem>>, vector<16x96xbf16>,
    return
  }
  func.func @transform_0(%arg0: i32) -> (i32, i32) {
    %c0_i32 = arith.constant 0 : i32
    %c0_i32_0 = arith.constant 0 : i32
    return %arg0, %c0_i32 : i32, i32
  }
  func.func @transform_1(%arg0: i32) -> (i32, i32) {
    %c0_i32 = arith.constant 0 : i32
    %c0_i32_0 = arith.constant 0 : i32
    %c0_i32_1 = arith.constant 0 : i32
    return %c0_i32, %c0_i32_0 : i32, i32
  }
  func.func @transform_2(%arg0: i32) -> (i32, i32) {
    %c0_i32 = arith.constant 0 : i32
    %c0_i32_0 = arith.constant 0 : i32
    %c0_i32_1 = arith.constant 0 : i32
    return %c0_i32, %c0_i32_0 : i32, i32
  }
  func.func @transform_3(%arg0: i32) -> (i32, i32) {
    %c0_i32 = arith.constant 0 : i32
    %c0_i32_0 = arith.constant 0 : i32
    return %arg0, %c0_i32 : i32, i32
  }
}

module attributes {stable_mosaic.version = 11 : i64} {
  func.func @_attention_kernel(%arg0: i32, %arg1: memref<1x8x96xbf16, #tpu.memory_space<vmem>>, %arg2: memref<1x8x32xbf16, #tpu.memory_space<vmem>>, %arg3: memref<1x4x8x8xbf16, #tpu.memory_space<vmem>>) attributes {dimension_semantics = [#tpu.dimension_semantics<parallel>], iteration_bounds = array<i64: 2>, scalar_prefetch = 0 : i64, scratch_operands = 0 : i64, tpu.core_type = #tpu.core_type<tc>, window_params = [{transform_indices = @transform_0, window_bounds = array<i64: 1, 8, 96>}, {transform_indices = @transform_1, window_bounds = array<i64: 1, 8, 32>}, {transform_indices = @transform_2, window_bounds = array<i64: 1, 4, 8, 8>}]} {
    %c0 = arith.constant 0 : index
    %c0_0 = arith.constant 0 : index
    %c0_1 = arith.constant 0 : index
    %0 = vector.load %arg1[%c0, %c0_0, %c0_1] : memref<1x8x96xbf16, #tpu.memory_space<vmem>>, vector<1x8x96xbf16>
    %1 = vector.shape_cast %0 : vector<1x8x96xbf16> to vector<8x96xbf16>
    %2 = vector.extract_strided_slice %1 {offsets = [0, 0], sizes = [8, 8], strides = [1, 1]} : vector<8x96xbf16> to vector<8x8xbf16>
    %3 = vector.extract_strided_slice %1 {offsets = [0, 32], sizes = [8, 8], strides = [1, 1]} : vector<8x96xbf16> to vector<8x8xbf16>
    %4 = vector.extract_strided_slice %1 {offsets = [0, 64], sizes = [8, 8], strides = [1, 1]} : vector<8x96xbf16> to vector<8x8xbf16>
    %5 = tpu.transpose %3, [1, 0] : vector<8x8xbf16> -> vector<8x8xbf16>
    %cst = arith.constant dense<0.000000e+00> : vector<8x8xf32>
    %6 = tpu.matmul %2, %5, %cst {dimension_numbers = #tpu.dot_dimension_numbers<[1], [0], [0], [1], [0, 0, 1, 1], [], []>} : vector<8x8xbf16>, vector<8x8xbf16>, vector<8x8xf32> -> vector<8x8xf32>
    %cst_2 = arith.constant 0.353553385 : f32
    %7 = vector.broadcast %cst_2 : f32 to vector<8x8xf32>
    %8 = arith.mulf %6, %7 : vector<8x8xf32>
    %cst_3 = arith.constant dense<0xFF800000> : vector<8xf32>
    %9 = vector.multi_reduction <maximumf>, %8, %cst_3 [1] : vector<8x8xf32> to vector<8xf32>
    %10 = vector.shape_cast %9 : vector<8xf32> to vector<8x1xf32>
    %11 = vector.broadcast %10 : vector<8x1xf32> to vector<8x8xf32>
    %12 = arith.subf %8, %11 : vector<8x8xf32>
    %13 = math.exp %12 : vector<8x8xf32>
    %cst_4 = arith.constant dense<0.000000e+00> : vector<8xf32>
    %14 = vector.multi_reduction <add>, %13, %cst_4 [1] : vector<8x8xf32> to vector<8xf32>
    %15 = vector.shape_cast %14 : vector<8xf32> to vector<8x1xf32>
    %16 = tpu.reciprocal %15 {approx = true} : vector<8x1xf32> -> vector<8x1xf32>
    %17 = vector.broadcast %16 : vector<8x1xf32> to vector<8x8xf32>
    %18 = arith.mulf %13, %17 : vector<8x8xf32>
    %19 = arith.truncf %18 : vector<8x8xf32> to vector<8x8xbf16>
    %c0_5 = arith.constant 0 : index
    %c0_6 = arith.constant 0 : index
    %c0_7 = arith.constant 0 : index
    %c0_8 = arith.constant 0 : index
    %20 = vector.load %arg3[%c0_5, %c0_6, %c0_7, %c0_8] : memref<1x4x8x8xbf16, #tpu.memory_space<vmem>>, vector<1x1x8x8xbf16>
    %21 = vector.shape_cast %20 : vector<1x1x8x8xbf16> to vector<8x8xbf16>
    %22 = vector.shape_cast %19 : vector<8x8xbf16> to vector<1x1x8x8xbf16>
    tpu.vector_store %arg3[%c0_5, %c0_6, %c0_7, %c0_8], %22 {strides = array<i32>} : memref<1x4x8x8xbf16, #tpu.memory_space<vmem>>, vector<1x1x8x8xbf16>,
    %23 = arith.truncf %18 : vector<8x8xf32> to vector<8x8xbf16>
    %cst_9 = arith.constant dense<0.000000e+00> : vector<8x8xf32>
    %24 = tpu.matmul %23, %4, %cst_9 {dimension_numbers = #tpu.dot_dimension_numbers<[1], [0], [0], [1], [0, 0, 1, 1], [], []>} : vector<8x8xbf16>, vector<8x8xbf16>, vector<8x8xf32> -> vector<8x8xf32>
    %25 = vector.extract_strided_slice %1 {offsets = [0, 8], sizes = [8, 8], strides = [1, 1]} : vector<8x96xbf16> to vector<8x8xbf16>
    %26 = vector.extract_strided_slice %1 {offsets = [0, 40], sizes = [8, 8], strides = [1, 1]} : vector<8x96xbf16> to vector<8x8xbf16>
    %27 = vector.extract_strided_slice %1 {offsets = [0, 72], sizes = [8, 8], strides = [1, 1]} : vector<8x96xbf16> to vector<8x8xbf16>
    %28 = tpu.transpose %26, [1, 0] : vector<8x8xbf16> -> vector<8x8xbf16>
    %cst_10 = arith.constant dense<0.000000e+00> : vector<8x8xf32>
    %29 = tpu.matmul %25, %28, %cst_10 {dimension_numbers = #tpu.dot_dimension_numbers<[1], [0], [0], [1], [0, 0, 1, 1], [], []>} : vector<8x8xbf16>, vector<8x8xbf16>, vector<8x8xf32> -> vector<8x8xf32>
    %cst_11 = arith.constant 0.353553385 : f32
    %30 = vector.broadcast %cst_11 : f32 to vector<8x8xf32>
    %31 = arith.mulf %29, %30 : vector<8x8xf32>
    %cst_12 = arith.constant dense<0xFF800000> : vector<8xf32>
    %32 = vector.multi_reduction <maximumf>, %31, %cst_12 [1] : vector<8x8xf32> to vector<8xf32>
    %33 = vector.shape_cast %32 : vector<8xf32> to vector<8x1xf32>
    %34 = vector.broadcast %33 : vector<8x1xf32> to vector<8x8xf32>
    %35 = arith.subf %31, %34 : vector<8x8xf32>
    %36 = math.exp %35 : vector<8x8xf32>
    %cst_13 = arith.constant dense<0.000000e+00> : vector<8xf32>
    %37 = vector.multi_reduction <add>, %36, %cst_13 [1] : vector<8x8xf32> to vector<8xf32>
    %38 = vector.shape_cast %37 : vector<8xf32> to vector<8x1xf32>
    %39 = tpu.reciprocal %38 {approx = true} : vector<8x1xf32> -> vector<8x1xf32>
    %40 = vector.broadcast %39 : vector<8x1xf32> to vector<8x8xf32>
    %41 = arith.mulf %36, %40 : vector<8x8xf32>
    %42 = arith.truncf %41 : vector<8x8xf32> to vector<8x8xbf16>
    %c0_14 = arith.constant 0 : index
    %c1 = arith.constant 1 : index
    %c0_15 = arith.constant 0 : index
    %c0_16 = arith.constant 0 : index
    %43 = vector.load %arg3[%c0_14, %c1, %c0_15, %c0_16] : memref<1x4x8x8xbf16, #tpu.memory_space<vmem>>, vector<1x1x8x8xbf16>
    %44 = vector.shape_cast %43 : vector<1x1x8x8xbf16> to vector<8x8xbf16>
    %45 = vector.shape_cast %42 : vector<8x8xbf16> to vector<1x1x8x8xbf16>
    tpu.vector_store %arg3[%c0_14, %c1, %c0_15, %c0_16], %45 {strides = array<i32>} : memref<1x4x8x8xbf16, #tpu.memory_space<vmem>>, vector<1x1x8x8xbf16>,
    %46 = arith.truncf %41 : vector<8x8xf32> to vector<8x8xbf16>
    %cst_17 = arith.constant dense<0.000000e+00> : vector<8x8xf32>
    %47 = tpu.matmul %46, %27, %cst_17 {dimension_numbers = #tpu.dot_dimension_numbers<[1], [0], [0], [1], [0, 0, 1, 1], [], []>} : vector<8x8xbf16>, vector<8x8xbf16>, vector<8x8xf32> -> vector<8x8xf32>
    %48 = vector.extract_strided_slice %1 {offsets = [0, 16], sizes = [8, 8], strides = [1, 1]} : vector<8x96xbf16> to vector<8x8xbf16>
    %49 = vector.extract_strided_slice %1 {offsets = [0, 48], sizes = [8, 8], strides = [1, 1]} : vector<8x96xbf16> to vector<8x8xbf16>
    %50 = vector.extract_strided_slice %1 {offsets = [0, 80], sizes = [8, 8], strides = [1, 1]} : vector<8x96xbf16> to vector<8x8xbf16>
    %51 = tpu.transpose %49, [1, 0] : vector<8x8xbf16> -> vector<8x8xbf16>
    %cst_18 = arith.constant dense<0.000000e+00> : vector<8x8xf32>
    %52 = tpu.matmul %48, %51, %cst_18 {dimension_numbers = #tpu.dot_dimension_numbers<[1], [0], [0], [1], [0, 0, 1, 1], [], []>} : vector<8x8xbf16>, vector<8x8xbf16>, vector<8x8xf32> -> vector<8x8xf32>
    %cst_19 = arith.constant 0.353553385 : f32
    %53 = vector.broadcast %cst_19 : f32 to vector<8x8xf32>
    %54 = arith.mulf %52, %53 : vector<8x8xf32>
    %cst_20 = arith.constant dense<0xFF800000> : vector<8xf32>
    %55 = vector.multi_reduction <maximumf>, %54, %cst_20 [1] : vector<8x8xf32> to vector<8xf32>
    %56 = vector.shape_cast %55 : vector<8xf32> to vector<8x1xf32>
    %57 = vector.broadcast %56 : vector<8x1xf32> to vector<8x8xf32>
    %58 = arith.subf %54, %57 : vector<8x8xf32>
    %59 = math.exp %58 : vector<8x8xf32>
    %cst_21 = arith.constant dense<0.000000e+00> : vector<8xf32>
    %60 = vector.multi_reduction <add>, %59, %cst_21 [1] : vector<8x8xf32> to vector<8xf32>
    %61 = vector.shape_cast %60 : vector<8xf32> to vector<8x1xf32>
    %62 = tpu.reciprocal %61 {approx = true} : vector<8x1xf32> -> vector<8x1xf32>
    %63 = vector.broadcast %62 : vector<8x1xf32> to vector<8x8xf32>
    %64 = arith.mulf %59, %63 : vector<8x8xf32>
    %65 = arith.truncf %64 : vector<8x8xf32> to vector<8x8xbf16>
    %c0_22 = arith.constant 0 : index
    %c2 = arith.constant 2 : index
    %c0_23 = arith.constant 0 : index
    %c0_24 = arith.constant 0 : index
    %66 = vector.load %arg3[%c0_22, %c2, %c0_23, %c0_24] : memref<1x4x8x8xbf16, #tpu.memory_space<vmem>>, vector<1x1x8x8xbf16>
    %67 = vector.shape_cast %66 : vector<1x1x8x8xbf16> to vector<8x8xbf16>
    %68 = vector.shape_cast %65 : vector<8x8xbf16> to vector<1x1x8x8xbf16>
    tpu.vector_store %arg3[%c0_22, %c2, %c0_23, %c0_24], %68 {strides = array<i32>} : memref<1x4x8x8xbf16, #tpu.memory_space<vmem>>, vector<1x1x8x8xbf16>,
    %69 = arith.truncf %64 : vector<8x8xf32> to vector<8x8xbf16>
    %cst_25 = arith.constant dense<0.000000e+00> : vector<8x8xf32>
    %70 = tpu.matmul %69, %50, %cst_25 {dimension_numbers = #tpu.dot_dimension_numbers<[1], [0], [0], [1], [0, 0, 1, 1], [], []>} : vector<8x8xbf16>, vector<8x8xbf16>, vector<8x8xf32> -> vector<8x8xf32>
    %71 = vector.extract_strided_slice %1 {offsets = [0, 24], sizes = [8, 8], strides = [1, 1]} : vector<8x96xbf16> to vector<8x8xbf16>
    %72 = vector.extract_strided_slice %1 {offsets = [0, 56], sizes = [8, 8], strides = [1, 1]} : vector<8x96xbf16> to vector<8x8xbf16>
    %73 = vector.extract_strided_slice %1 {offsets = [0, 88], sizes = [8, 8], strides = [1, 1]} : vector<8x96xbf16> to vector<8x8xbf16>
    %74 = tpu.transpose %72, [1, 0] : vector<8x8xbf16> -> vector<8x8xbf16>
    %cst_26 = arith.constant dense<0.000000e+00> : vector<8x8xf32>
    %75 = tpu.matmul %71, %74, %cst_26 {dimension_numbers = #tpu.dot_dimension_numbers<[1], [0], [0], [1], [0, 0, 1, 1], [], []>} : vector<8x8xbf16>, vector<8x8xbf16>, vector<8x8xf32> -> vector<8x8xf32>
    %cst_27 = arith.constant 0.353553385 : f32
    %76 = vector.broadcast %cst_27 : f32 to vector<8x8xf32>
    %77 = arith.mulf %75, %76 : vector<8x8xf32>
    %cst_28 = arith.constant dense<0xFF800000> : vector<8xf32>
    %78 = vector.multi_reduction <maximumf>, %77, %cst_28 [1] : vector<8x8xf32> to vector<8xf32>
    %79 = vector.shape_cast %78 : vector<8xf32> to vector<8x1xf32>
    %80 = vector.broadcast %79 : vector<8x1xf32> to vector<8x8xf32>
    %81 = arith.subf %77, %80 : vector<8x8xf32>
    %82 = math.exp %81 : vector<8x8xf32>
    %cst_29 = arith.constant dense<0.000000e+00> : vector<8xf32>
    %83 = vector.multi_reduction <add>, %82, %cst_29 [1] : vector<8x8xf32> to vector<8xf32>
    %84 = vector.shape_cast %83 : vector<8xf32> to vector<8x1xf32>
    %85 = tpu.reciprocal %84 {approx = true} : vector<8x1xf32> -> vector<8x1xf32>
    %86 = vector.broadcast %85 : vector<8x1xf32> to vector<8x8xf32>
    %87 = arith.mulf %82, %86 : vector<8x8xf32>
    %88 = arith.truncf %87 : vector<8x8xf32> to vector<8x8xbf16>
    %c0_30 = arith.constant 0 : index
    %c3 = arith.constant 3 : index
    %c0_31 = arith.constant 0 : index
    %c0_32 = arith.constant 0 : index
    %89 = vector.load %arg3[%c0_30, %c3, %c0_31, %c0_32] : memref<1x4x8x8xbf16, #tpu.memory_space<vmem>>, vector<1x1x8x8xbf16>
    %90 = vector.shape_cast %89 : vector<1x1x8x8xbf16> to vector<8x8xbf16>
    %91 = vector.shape_cast %88 : vector<8x8xbf16> to vector<1x1x8x8xbf16>
    tpu.vector_store %arg3[%c0_30, %c3, %c0_31, %c0_32], %91 {strides = array<i32>} : memref<1x4x8x8xbf16, #tpu.memory_space<vmem>>, vector<1x1x8x8xbf16>,
    %92 = arith.truncf %87 : vector<8x8xf32> to vector<8x8xbf16>
    %cst_33 = arith.constant dense<0.000000e+00> : vector<8x8xf32>
    %93 = tpu.matmul %92, %73, %cst_33 {dimension_numbers = #tpu.dot_dimension_numbers<[1], [0], [0], [1], [0, 0, 1, 1], [], []>} : vector<8x8xbf16>, vector<8x8xbf16>, vector<8x8xf32> -> vector<8x8xf32>
    %94 = tpu.concatenate %24, %47, %70, %93 in 1 : vector<8x8xf32>, vector<8x8xf32>, vector<8x8xf32>, vector<8x8xf32> -> vector<8x32xf32>
    %95 = arith.truncf %94 : vector<8x32xf32> to vector<8x32xbf16>
    %c0_34 = arith.constant 0 : index
    %c0_35 = arith.constant 0 : index
    %c0_36 = arith.constant 0 : index
    %96 = vector.load %arg2[%c0_34, %c0_35, %c0_36] : memref<1x8x32xbf16, #tpu.memory_space<vmem>>, vector<1x8x32xbf16>
    %97 = vector.shape_cast %96 : vector<1x8x32xbf16> to vector<8x32xbf16>
    %98 = vector.shape_cast %95 : vector<8x32xbf16> to vector<1x8x32xbf16>
    tpu.vector_store %arg2[%c0_34, %c0_35, %c0_36], %98 {strides = array<i32>} : memref<1x8x32xbf16, #tpu.memory_space<vmem>>, vector<1x8x32xbf16>,
    return
  }
  func.func @transform_0(%arg0: i32) -> (i32, i32, i32) {
    %c0_i32 = arith.constant 0 : i32
    %c0_i32_0 = arith.constant 0 : i32
    %c0_i32_1 = arith.constant 0 : i32
    return %arg0, %c0_i32, %c0_i32_0 : i32, i32, i32
  }
  func.func @transform_1(%arg0: i32) -> (i32, i32, i32) {
    %c0_i32 = arith.constant 0 : i32
    %c0_i32_0 = arith.constant 0 : i32
    %c0_i32_1 = arith.constant 0 : i32
    return %arg0, %c0_i32, %c0_i32_0 : i32, i32, i32
  }
  func.func @transform_2(%arg0: i32) -> (i32, i32, i32, i32) {
    %c0_i32 = arith.constant 0 : i32
    %c0_i32_0 = arith.constant 0 : i32
    %c0_i32_1 = arith.constant 0 : i32
    %c0_i32_2 = arith.constant 0 : i32
    return %arg0, %c0_i32, %c0_i32_0, %c0_i32_1 : i32, i32, i32, i32
  }
}

module attributes {stable_mosaic.version = 11 : i64} {
  func.func @_out_ffn_kernel(%arg0: i32, %arg1: memref<16x32xf32, #tpu.memory_space<vmem>>, %arg2: memref<16x32xbf16, #tpu.memory_space<vmem>>, %arg3: memref<32x32xbf16, #tpu.memory_space<vmem>>, %arg4: memref<1x32xf32, #tpu.memory_space<vmem>>, %arg5: memref<32x64xbf16, #tpu.memory_space<vmem>>, %arg6: memref<1x64xf32, #tpu.memory_space<vmem>>, %arg7: memref<64x32xbf16, #tpu.memory_space<vmem>>, %arg8: memref<1x32xf32, #tpu.memory_space<vmem>>, %arg9: memref<1x32xf32, #tpu.memory_space<vmem>>, %arg10: memref<1x32xf32, #tpu.memory_space<vmem>>, %arg11: memref<1x32xf32, #tpu.memory_space<vmem>>, %arg12: memref<1x32xf32, #tpu.memory_space<vmem>>, %arg13: memref<16x32xf32, #tpu.memory_space<vmem>>) attributes {dimension_semantics = [#tpu.dimension_semantics<parallel>], iteration_bounds = array<i64: 1>, scalar_prefetch = 0 : i64, scratch_operands = 0 : i64, tpu.core_type = #tpu.core_type<tc>, window_params = [{transform_indices = @transform_0, window_bounds = array<i64: 16, 32>}, {transform_indices = @transform_1, window_bounds = array<i64: 16, 32>}, {pipeline_mode = #tpu.pipeline_mode<synchronous>, transform_indices = @transform_2, window_bounds = array<i64: 32, 32>}, {pipeline_mode = #tpu.pipeline_mode<synchronous>, transform_indices = @transform_3, window_bounds = array<i64: 1, 32>}, {pipeline_mode = #tpu.pipeline_mode<synchronous>, transform_indices = @transform_4, window_bounds = array<i64: 32, 64>}, {pipeline_mode = #tpu.pipeline_mode<synchronous>, transform_indices = @transform_5, window_bounds = array<i64: 1, 64>}, {pipeline_mode = #tpu.pipeline_mode<synchronous>, transform_indices = @transform_6, window_bounds = array<i64: 64, 32>}, {pipeline_mode = #tpu.pipeline_mode<synchronous>, transform_indices = @transform_7, window_bounds = array<i64: 1, 32>}, {pipeline_mode = #tpu.pipeline_mode<synchronous>, transform_indices = @transform_8, window_bounds = array<i64: 1, 32>}, {pipeline_mode = #tpu.pipeline_mode<synchronous>, transform_indices = @transform_9, window_bounds = array<i64: 1, 32>}, {pipeline_mode = #tpu.pipeline_mode<synchronous>, transform_indices = @transform_10, window_bounds = array<i64: 1, 32>}, {pipeline_mode = #tpu.pipeline_mode<synchronous>, transform_indices = @transform_11, window_bounds = array<i64: 1, 32>}, {transform_indices = @transform_12, window_bounds = array<i64: 16, 32>}]} {
    %c0 = arith.constant 0 : index
    %c0_0 = arith.constant 0 : index
    %0 = vector.load %arg1[%c0, %c0_0] : memref<16x32xf32, #tpu.memory_space<vmem>>, vector<16x32xf32>
    %c0_1 = arith.constant 0 : index
    %c0_2 = arith.constant 0 : index
    %1 = vector.load %arg2[%c0_1, %c0_2] : memref<16x32xbf16, #tpu.memory_space<vmem>>, vector<16x32xbf16>
    %c0_3 = arith.constant 0 : index
    %c0_4 = arith.constant 0 : index
    %2 = vector.load %arg3[%c0_3, %c0_4] : memref<32x32xbf16, #tpu.memory_space<vmem>>, vector<32x32xbf16>
    %cst = arith.constant dense<0.000000e+00> : vector<16x32xf32>
    %3 = tpu.matmul %1, %2, %cst {dimension_numbers = #tpu.dot_dimension_numbers<[1], [0], [0], [1], [0, 0, 1, 1], [], []>} : vector<16x32xbf16>, vector<32x32xbf16>, vector<16x32xf32> -> vector<16x32xf32>
    %c0_5 = arith.constant 0 : index
    %c0_6 = arith.constant 0 : index
    %4 = vector.load %arg4[%c0_5, %c0_6] : memref<1x32xf32, #tpu.memory_space<vmem>>, vector<1x32xf32>
    %5 = vector.broadcast %4 : vector<1x32xf32> to vector<16x32xf32>
    %6 = arith.addf %3, %5 : vector<16x32xf32>
    %7 = arith.addf %0, %6 : vector<16x32xf32>
    %c0_7 = arith.constant 0 : index
    %c0_8 = arith.constant 0 : index
    %8 = vector.load %arg9[%c0_7, %c0_8] : memref<1x32xf32, #tpu.memory_space<vmem>>, vector<1x32xf32>
    %c0_9 = arith.constant 0 : index
    %c0_10 = arith.constant 0 : index
    %9 = vector.load %arg10[%c0_9, %c0_10] : memref<1x32xf32, #tpu.memory_space<vmem>>, vector<1x32xf32>
    %cst_11 = arith.constant dense<0.000000e+00> : vector<16xf32>
    %10 = vector.multi_reduction <add>, %7, %cst_11 [1] : vector<16x32xf32> to vector<16xf32>
    %11 = vector.shape_cast %10 : vector<16xf32> to vector<16x1xf32>
    %cst_12 = arith.constant 3.200000e+01 : f32
    %12 = vector.broadcast %cst_12 : f32 to vector<16x1xf32>
    %13 = arith.divf %11, %12 : vector<16x1xf32>
    %14 = vector.broadcast %13 : vector<16x1xf32> to vector<16x32xf32>
    %15 = arith.subf %7, %14 : vector<16x32xf32>
    %16 = arith.mulf %15, %15 : vector<16x32xf32>
    %cst_13 = arith.constant dense<0.000000e+00> : vector<16xf32>
    %17 = vector.multi_reduction <add>, %16, %cst_13 [1] : vector<16x32xf32> to vector<16xf32>
    %18 = vector.shape_cast %17 : vector<16xf32> to vector<16x1xf32>
    %cst_14 = arith.constant 3.200000e+01 : f32
    %19 = vector.broadcast %cst_14 : f32 to vector<16x1xf32>
    %20 = arith.divf %18, %19 : vector<16x1xf32>
    %21 = vector.broadcast %13 : vector<16x1xf32> to vector<16x32xf32>
    %22 = arith.subf %7, %21 : vector<16x32xf32>
    %cst_15 = arith.constant 9.99999974E-6 : f32
    %23 = vector.broadcast %cst_15 : f32 to vector<16x1xf32>
    %24 = arith.addf %20, %23 : vector<16x1xf32>
    %25 = math.rsqrt %24 : vector<16x1xf32>
    %26 = vector.broadcast %25 : vector<16x1xf32> to vector<16x32xf32>
    %27 = arith.mulf %22, %26 : vector<16x32xf32>
    %28 = vector.broadcast %8 : vector<1x32xf32> to vector<16x32xf32>
    %29 = arith.mulf %27, %28 : vector<16x32xf32>
    %30 = vector.broadcast %9 : vector<1x32xf32> to vector<16x32xf32>
    %31 = arith.addf %29, %30 : vector<16x32xf32>
    %32 = arith.truncf %31 : vector<16x32xf32> to vector<16x32xbf16>
    %c0_16 = arith.constant 0 : index
    %c0_17 = arith.constant 0 : index
    %33 = vector.load %arg5[%c0_16, %c0_17] : memref<32x64xbf16, #tpu.memory_space<vmem>>, vector<32x64xbf16>
    %cst_18 = arith.constant dense<0.000000e+00> : vector<16x64xf32>
    %34 = tpu.matmul %32, %33, %cst_18 {dimension_numbers = #tpu.dot_dimension_numbers<[1], [0], [0], [1], [0, 0, 1, 1], [], []>} : vector<16x32xbf16>, vector<32x64xbf16>, vector<16x64xf32> -> vector<16x64xf32>
    %c0_19 = arith.constant 0 : index
    %c0_20 = arith.constant 0 : index
    %35 = vector.load %arg6[%c0_19, %c0_20] : memref<1x64xf32, #tpu.memory_space<vmem>>, vector<1x64xf32>
    %36 = vector.broadcast %35 : vector<1x64xf32> to vector<16x64xf32>
    %37 = arith.addf %34, %36 : vector<16x64xf32>
    %cst_21 = arith.constant 0.000000e+00 : f32
    %38 = vector.broadcast %cst_21 : f32 to vector<16x64xf32>
    %39 = arith.maximumf %37, %38 : vector<16x64xf32>
    %40 = arith.truncf %39 : vector<16x64xf32> to vector<16x64xbf16>
    %c0_22 = arith.constant 0 : index
    %c0_23 = arith.constant 0 : index
    %41 = vector.load %arg7[%c0_22, %c0_23] : memref<64x32xbf16, #tpu.memory_space<vmem>>, vector<64x32xbf16>
    %cst_24 = arith.constant dense<0.000000e+00> : vector<16x32xf32>
    %42 = tpu.matmul %40, %41, %cst_24 {dimension_numbers = #tpu.dot_dimension_numbers<[1], [0], [0], [1], [0, 0, 1, 1], [], []>} : vector<16x64xbf16>, vector<64x32xbf16>, vector<16x32xf32> -> vector<16x32xf32>
    %c0_25 = arith.constant 0 : index
    %c0_26 = arith.constant 0 : index
    %43 = vector.load %arg8[%c0_25, %c0_26] : memref<1x32xf32, #tpu.memory_space<vmem>>, vector<1x32xf32>
    %44 = vector.broadcast %43 : vector<1x32xf32> to vector<16x32xf32>
    %45 = arith.addf %42, %44 : vector<16x32xf32>
    %46 = arith.addf %31, %45 : vector<16x32xf32>
    %c0_27 = arith.constant 0 : index
    %c0_28 = arith.constant 0 : index
    %47 = vector.load %arg11[%c0_27, %c0_28] : memref<1x32xf32, #tpu.memory_space<vmem>>, vector<1x32xf32>
    %c0_29 = arith.constant 0 : index
    %c0_30 = arith.constant 0 : index
    %48 = vector.load %arg12[%c0_29, %c0_30] : memref<1x32xf32, #tpu.memory_space<vmem>>, vector<1x32xf32>
    %cst_31 = arith.constant dense<0.000000e+00> : vector<16xf32>
    %49 = vector.multi_reduction <add>, %46, %cst_31 [1] : vector<16x32xf32> to vector<16xf32>
    %50 = vector.shape_cast %49 : vector<16xf32> to vector<16x1xf32>
    %cst_32 = arith.constant 3.200000e+01 : f32
    %51 = vector.broadcast %cst_32 : f32 to vector<16x1xf32>
    %52 = arith.divf %50, %51 : vector<16x1xf32>
    %53 = vector.broadcast %52 : vector<16x1xf32> to vector<16x32xf32>
    %54 = arith.subf %46, %53 : vector<16x32xf32>
    %55 = arith.mulf %54, %54 : vector<16x32xf32>
    %cst_33 = arith.constant dense<0.000000e+00> : vector<16xf32>
    %56 = vector.multi_reduction <add>, %55, %cst_33 [1] : vector<16x32xf32> to vector<16xf32>
    %57 = vector.shape_cast %56 : vector<16xf32> to vector<16x1xf32>
    %cst_34 = arith.constant 3.200000e+01 : f32
    %58 = vector.broadcast %cst_34 : f32 to vector<16x1xf32>
    %59 = arith.divf %57, %58 : vector<16x1xf32>
    %60 = vector.broadcast %52 : vector<16x1xf32> to vector<16x32xf32>
    %61 = arith.subf %46, %60 : vector<16x32xf32>
    %cst_35 = arith.constant 9.99999974E-6 : f32
    %62 = vector.broadcast %cst_35 : f32 to vector<16x1xf32>
    %63 = arith.addf %59, %62 : vector<16x1xf32>
    %64 = math.rsqrt %63 : vector<16x1xf32>
    %65 = vector.broadcast %64 : vector<16x1xf32> to vector<16x32xf32>
    %66 = arith.mulf %61, %65 : vector<16x32xf32>
    %67 = vector.broadcast %47 : vector<1x32xf32> to vector<16x32xf32>
    %68 = arith.mulf %66, %67 : vector<16x32xf32>
    %69 = vector.broadcast %48 : vector<1x32xf32> to vector<16x32xf32>
    %70 = arith.addf %68, %69 : vector<16x32xf32>
    %c0_36 = arith.constant 0 : index
    %c0_37 = arith.constant 0 : index
    %71 = vector.load %arg13[%c0_36, %c0_37] : memref<16x32xf32, #tpu.memory_space<vmem>>, vector<16x32xf32>
    tpu.vector_store %arg13[%c0_36, %c0_37], %70 {strides = array<i32>} : memref<16x32xf32, #tpu.memory_space<vmem>>, vector<16x32xf32>,
    return
  }
  func.func @transform_0(%arg0: i32) -> (i32, i32) {
    %c0_i32 = arith.constant 0 : i32
    %c0_i32_0 = arith.constant 0 : i32
    return %arg0, %c0_i32 : i32, i32
  }
  func.func @transform_1(%arg0: i32) -> (i32, i32) {
    %c0_i32 = arith.constant 0 : i32
    %c0_i32_0 = arith.constant 0 : i32
    return %arg0, %c0_i32 : i32, i32
  }
  func.func @transform_2(%arg0: i32) -> (i32, i32) {
    %c0_i32 = arith.constant 0 : i32
    %c0_i32_0 = arith.constant 0 : i32
    %c0_i32_1 = arith.constant 0 : i32
    return %c0_i32, %c0_i32_0 : i32, i32
  }
  func.func @transform_3(%arg0: i32) -> (i32, i32) {
    %c0_i32 = arith.constant 0 : i32
    %c0_i32_0 = arith.constant 0 : i32
    %c0_i32_1 = arith.constant 0 : i32
    return %c0_i32, %c0_i32_0 : i32, i32
  }
  func.func @transform_4(%arg0: i32) -> (i32, i32) {
    %c0_i32 = arith.constant 0 : i32
    %c0_i32_0 = arith.constant 0 : i32
    %c0_i32_1 = arith.constant 0 : i32
    return %c0_i32, %c0_i32_0 : i32, i32
  }
  func.func @transform_5(%arg0: i32) -> (i32, i32) {
    %c0_i32 = arith.constant 0 : i32
    %c0_i32_0 = arith.constant 0 : i32
    %c0_i32_1 = arith.constant 0 : i32
    return %c0_i32, %c0_i32_0 : i32, i32
  }
  func.func @transform_6(%arg0: i32) -> (i32, i32) {
    %c0_i32 = arith.constant 0 : i32
    %c0_i32_0 = arith.constant 0 : i32
    %c0_i32_1 = arith.constant 0 : i32
    return %c0_i32, %c0_i32_0 : i32, i32
  }
  func.func @transform_7(%arg0: i32) -> (i32, i32) {
    %c0_i32 = arith.constant 0 : i32
    %c0_i32_0 = arith.constant 0 : i32
    %c0_i32_1 = arith.constant 0 : i32
    return %c0_i32, %c0_i32_0 : i32, i32
  }
  func.func @transform_8(%arg0: i32) -> (i32, i32) {
    %c0_i32 = arith.constant 0 : i32
    %c0_i32_0 = arith.constant 0 : i32
    %c0_i32_1 = arith.constant 0 : i32
    return %c0_i32, %c0_i32_0 : i32, i32
  }
  func.func @transform_9(%arg0: i32) -> (i32, i32) {
    %c0_i32 = arith.constant 0 : i32
    %c0_i32_0 = arith.constant 0 : i32
    %c0_i32_1 = arith.constant 0 : i32
    return %c0_i32, %c0_i32_0 : i32, i32
  }
  func.func @transform_10(%arg0: i32) -> (i32, i32) {
    %c0_i32 = arith.constant 0 : i32
    %c0_i32_0 = arith.constant 0 : i32
    %c0_i32_1 = arith.constant 0 : i32
    return %c0_i32, %c0_i32_0 : i32, i32
  }
  func.func @transform_11(%arg0: i32) -> (i32, i32) {
    %c0_i32 = arith.constant 0 : i32
    %c0_i32_0 = arith.constant 0 : i32
    %c0_i32_1 = arith.constant 0 : i32
    return %c0_i32, %c0_i32_0 : i32, i32
  }
  func.func @transform_12(%arg0: i32) -> (i32, i32) {
    %c0_i32 = arith.constant 0 : i32
    %c0_i32_0 = arith.constant 0 : i32
    return %arg0, %c0_i32 : i32, i32
  }
}

</mosaic_0001>

<llo_original>
// kernel: encoder_layer_forward.3
$region0: #{encoder_layer_forward.3}
  #allocation0 [shape = 'u32[]', space=smem, size = 0x4, offset = 0x4, fixed_abs, tag = 'smem constant byte address 0x4 - core index']
  #allocation1 [shape = 'u32[144,128]{1,0:T(1,128)}', space=vmem, size = 0x12000, scoped, tag = 'internal scratch']
  %s0 = inlined_call_operand.hbm [shape: f32[16,32], index: 0, kind: input, shape index: {}]
  %s1 = inlined_call_operand.hbm [shape: bf16[32,96], index: 1, kind: input, shape index: {}]
  %s2 = inlined_call_operand.hbm [shape: f32[1,96], index: 2, kind: input, shape index: {}]
  %s3 = inlined_call_operand.hbm [shape: bf16[16,96], index: 3, kind: output, shape index: {}]
  %s4 = sld [smem:[#allocation0]]
  $region34: #{encoder_layer_forward.3} parent=0
    _
  %s6 = ssub.s32 1, %s4
  %s7 = scalar_select 0, %s6, %s4
  $region1: #{encoder_layer_forward.3} parent=0
    #allocation2 [shape = 'u8[8192]{0}', space=vmem, size = 0x2000, scoped, tag = 'input window, operand 0, single buffered']
    #allocation3 [shape = 's32[1]{0}', space=sflag, size = 0x4, scoped, tag = 'scoped memory for encoder_layer_forward.3']
    #allocation4 [shape = 's32[1]{0}', space=sflag, size = 0x4, scoped, tag = 'scoped memory for encoder_layer_forward.3']
    #allocation5 [shape = 'u8[8192]{0}', space=vmem, size = 0x2000, scoped, tag = 'input window, operand 1, single buffered']
    #allocation6 [shape = 's32[1]{0}', space=sflag, size = 0x4, scoped, tag = 'scoped memory for encoder_layer_forward.3']
    #allocation7 [shape = 'u8[512]{0}', space=vmem, size = 0x400, scoped, tag = 'input window, operand 2, single buffered']
    #allocation8 [shape = 'u8[4096]{0}', space=vmem, size = 0x1000, scoped, tag = 'output window, operand 0, single buffered']
    %8 = vsyncpa [#allocation3], 0
    %9 = vsyncpa [#allocation6], 0
    %10 = vsyncpa [#allocation4], 0
    // Predicated region
    $region2: #{encoder_layer_forward.3} parent=1 // pred_check
      _
    $region3: #{encoder_layer_forward.3} parent=1 // pred_check_branch
      %12 = sbr.rel (0) target = $region5
    $region4: #{encoder_layer_forward.3} parent=1 // pred_region
      %s14 = ssub.s32 256, 256
      %15 = vsyncadd [#allocation3], %s14
      %s16 = sshll.u32 [#allocation2], 4
      %s17 = int_to_ptr.vmem [resolvable:$true] %s16
      %22 = dma.hbm_to_vmem [thread:$0]  %s0, 256, %s17, [#allocation3], 128, 128, 8
    $region5: #{encoder_layer_forward.3} parent=1 // pred_fallthru
      _
    // Predicated region
    $region6: #{encoder_layer_forward.3} parent=1 // pred_check
      _
    $region7: #{encoder_layer_forward.3} parent=1 // pred_check_branch
      %24 = sbr.rel (0) target = $region9
    $region8: #{encoder_layer_forward.3} parent=1 // pred_region
      %s26 = ssub.s32 256, 256
      %27 = vsyncadd [#allocation6], %s26
      %s28 = sshll.u32 [#allocation5], 4
      %s29 = int_to_ptr.vmem [resolvable:$true] %s28
      %34 = dma.hbm_to_vmem [thread:$0]  %s1, 256, %s29, [#allocation6], 64, 64, 4
    $region9: #{encoder_layer_forward.3} parent=1 // pred_fallthru
      _
    // Predicated region
    $region10: #{encoder_layer_forward.3} parent=1 // pred_check
      _
    $region11: #{encoder_layer_forward.3} parent=1 // pred_check_branch
      %36 = sbr.rel (0) target = $region13
    $region12: #{encoder_layer_forward.3} parent=1 // pred_region
      %s38 = ssub.s32 16, 16
      %39 = vsyncadd [#allocation6], %s38
      %s41 = sshll.u32 [#allocation7], 4
      %s42 = int_to_ptr.vmem [resolvable:$true] %s41
      %44 = dma.hbm_to_vmem [thread:$0]  %s2, 16, %s42, [#allocation6]
    $region13: #{encoder_layer_forward.3} parent=1 // pred_fallthru
      _
    // Predicated region
    $region14: #{encoder_layer_forward.3} parent=1 // pred_check
      _
    $region15: #{encoder_layer_forward.3} parent=1 // pred_check_branch
      %46 = sbr.rel (0) target = $region17
    $region16: #{encoder_layer_forward.3} parent=1 // pred_region
      %47 = dma.done [#allocation3], 256
    $region17: #{encoder_layer_forward.3} parent=1 // pred_fallthru
      _
    // Predicated region
    $region18: #{encoder_layer_forward.3} parent=1 // pred_check
      _
    $region19: #{encoder_layer_forward.3} parent=1 // pred_check_branch
      %49 = sbr.rel (0) target = $region21
    $region20: #{encoder_layer_forward.3} parent=1 // pred_region
      %50 = dma.done [#allocation6], 256
    $region21: #{encoder_layer_forward.3} parent=1 // pred_fallthru
      _
    // Predicated region
    $region22: #{encoder_layer_forward.3} parent=1 // pred_check
      _
    $region23: #{encoder_layer_forward.3} parent=1 // pred_check_branch
      %52 = sbr.rel (0) target = $region25
    $region24: #{encoder_layer_forward.3} parent=1 // pred_region
      %53 = dma.done [#allocation6], 16
    $region25: #{encoder_layer_forward.3} parent=1 // pred_fallthru
      _
    %v55 = vld [vmem:[#allocation2] sm:$0xff]
    %v56 = vld [vmem:[#allocation2 + $0x8] sm:$0xff]
    %v57 = vpack.c.bf16 %v56, %v55
    %v58 = vld [vmem:[#allocation5] sm:$0xf]
    %v59 = vld [vmem:[#allocation5 + $0x4] sm:$0xf]
    %v60 = vld [vmem:[#allocation5 + $0x8] sm:$0xf]
    %v61 = vld [vmem:[#allocation5 + $0xc] sm:$0xf]
    %v62 = vld [vmem:[#allocation7] sm:$0x1]
    %v64 = vlaneseq
    %v65 = vshrl.u32 %v64, 7
    %v66 = vsub.s32 0, %v65
    %v67 = vrot.slane %v62, %v66
    %v73 = vunpack.c.l.b16 %v58
    %v74 = vunpack.c.l.b16 %v59
    %v75 = vunpack.c.l.b16 %v60
    %v76 = vunpack.c.l.b16 %v61
    %v77 = vpack.c.b16 %v74, %v73
    %v78 = vpack.c.b16 %v76, %v75
    %vm81 = vcmask 261120
    %v83 = vsel %vm81, %v57, 0
    %85 = vmatprep.subr.bf16.mxu0 0
    %86 = vmatpush1.bf16.msra.mxu0 %v77
    %87 = vmatprep.subr.bf16.mxu0 0
    %88 = vmatpush1.bf16.msra.mxu0 %v78
    %89 = vmatprep.subr.bf16.mxu0 0
    %90 = vmatpush1.bf16.msra.mxu0 0
    %91 = vmatprep.subr.bf16.mxu0 0
    %92 = vmatpush1.bf16.msra.mxu0 0
    %93 = vmatprep.subr.bf16.mxu0 0
    %94 = vmatpush1.bf16.msra.mxu0 0
    %95 = vmatprep.subr.bf16.mxu0 0
    %96 = vmatpush1.bf16.msra.mxu0 0
    %97 = vmatprep.subr.bf16.mxu0 0
    %98 = vmatpush1.bf16.msra.mxu0 0
    %99 = vmatprep.subr.bf16.mxu0 0
    %100 = vmatpush1.bf16.msra.mxu0 0
    %101 = vmatprep.subr.bf16.mxu0 0
    %102 = vmatpush1.bf16.msra.mxu0 0
    %103 = vmatprep.subr.bf16.mxu0 0
    %104 = vmatpush1.bf16.msra.mxu0 0
    %105 = vmatprep.subr.bf16.mxu0 0
    %106 = vmatpush1.bf16.msra.mxu0 0
    %107 = vmatprep.subr.bf16.mxu0 0
    %108 = vmatpush1.bf16.msra.mxu0 0
    %109 = vmatprep.subr.bf16.mxu0 0
    %110 = vmatpush1.bf16.msra.mxu0 0
    %111 = vmatprep.subr.bf16.mxu0 0
    %112 = vmatpush1.bf16.msra.mxu0 0
    %113 = vmatprep.subr.bf16.mxu0 0
    %114 = vmatpush1.bf16.msra.mxu0 0
    %115 = vmatprep.subr.bf16.mxu0 0
    %116 = vmatpush1.bf16.msra.mxu0 0
    %117 = vmatprep.mubr.bf16.mxu0 0
    %118 = vmatmul.mubr.bf16.gmra.mrb[0].mxu0 %v83
    %v119 = vpop.f32.mrb[0].mxu0
    %v120 = vadd.f32 %v67, %v119
    %v121 = vpop.f32.mrb[0].mxu0
    %v122 = vpop.f32.mrb[0].mxu0
    %v123 = vadd.f32 %v67, %v122
    %v124 = vpop.f32.mrb[0].mxu0
    %125 = vdwg.mxu0
    %v126 = vpack.c.bf16 %v123, %v120
    %v128 = vunpack.c.l.b16 %v126
    %v129 = vunpack.c.h.b16 %v126
    %v130 = vpack.c.b16 %v128, %v128
    %v131 = vpack.c.b16 %v129, %v129
    %vm134 = vcmask 781312
    %135 = vst.msk [vmem:[#allocation8] sm:$0xf] %vm134, %v130
    %136 = vst.msk [vmem:[#allocation8 + $0x4] sm:$0xf] %vm134, %v131
    // Predicated region
    $region26: #{encoder_layer_forward.3} parent=1 // pred_check
      _
    $region27: #{encoder_layer_forward.3} parent=1 // pred_check_branch
      %138 = sbr.rel (0) target = $region29
    $region28: #{encoder_layer_forward.3} parent=1 // pred_region
      %s140 = ssub.s32 128, 128
      %141 = vsyncadd [#allocation4], %s140
      %s142 = sshll.u32 [#allocation8], 4
      %s143 = int_to_ptr.vmem [resolvable:$true] %s142
      %148 = dma.vmem_to_hbm [thread:$0]  %s143, 128, %s3, [#allocation4], 64, 64, 4
    $region29: #{encoder_layer_forward.3} parent=1 // pred_fallthru
      _
    // Predicated region
    $region30: #{encoder_layer_forward.3} parent=1 // pred_check
      _
    $region31: #{encoder_layer_forward.3} parent=1 // pred_check_branch
      %150 = sbr.rel (0) target = $region33
    $region32: #{encoder_layer_forward.3} parent=1 // pred_region
      %151 = dma.done [#allocation4], 128
    $region33: #{encoder_layer_forward.3} parent=1 // pred_fallthru
      _
    %152 = vsyncpa [#allocation3], 1
    %153 = vsyncpa [#allocation6], 1
    %154 = vsyncpa [#allocation4], 1

// kernel: encoder_layer_forward.4
$region0: #{encoder_layer_forward.4}
  #allocation0 [shape = 'u32[]', space=smem, size = 0x4, offset = 0x4, fixed_abs, tag = 'smem constant byte address 0x4 - core index']
  #allocation1 [shape = 'u32[144,128]{1,0:T(1,128)}', space=vmem, size = 0x12000, scoped, tag = 'internal scratch']
  %s0 = inlined_call_operand.hbm [shape: bf16[2,8,96], index: 0, kind: input, shape index: {}]
  %s1 = inlined_call_operand.hbm [shape: bf16[2,8,32], index: 1, kind: output, shape index: {0}]
  %s2 = inlined_call_operand.hbm [shape: bf16[2,4,8,8], index: 2, kind: output, shape index: {1}]
  %3 = xla_tuple %s1, %s2
  %s4 = sld [smem:[#allocation0]]
  $region49: #{encoder_layer_forward.4} parent=0
    _
  %s6 = ssub.s32 1, %s4
  %s7 = scalar_select 0, %s6, %s4
  $region1: #{encoder_layer_forward.4} parent=0
    #allocation2 [shape = 'u8[4096]{0}', space=vmem, size = 0x1000, scoped, tag = 'input window, operand 0']
    #allocation3 [shape = 's32[2]{0}', space=sflag, size = 0x8, scoped, tag = 'scoped memory for encoder_layer_forward.4']
    #allocation4 [shape = 's32[2]{0}', space=sflag, size = 0x8, scoped, tag = 'scoped memory for encoder_layer_forward.4']
    #allocation5 [shape = 'u8[4096]{0}', space=vmem, size = 0x1000, scoped, tag = 'output window, operand 0']
    #allocation6 [shape = 'u8[16384]{0}', space=vmem, size = 0x4000, scoped, tag = 'output window, operand 1']
    #allocation7 [shape = 's32[2]{0}', space=sflag, size = 0x8, scoped, tag = 'scoped memory for encoder_layer_forward.4']
    %8 = vsyncpa [#allocation3], 0
    %s9 = scalar_lea.sflag [#allocation3], 1
    %10 = vsyncpa %s9, 0
    %11 = vsyncpa [#allocation4], 0
    %s12 = scalar_lea.sflag [#allocation4], 1
    %13 = vsyncpa %s12, 0
    %14 = vsyncpa [#allocation7], 0
    %s15 = scalar_lea.sflag [#allocation7], 1
    %16 = vsyncpa %s15, 0
    loop: start=0, step=1, limit=4
    $region2: #{encoder_layer_forward.4} parent=1 // loop_pre_header
      _
    $region3: #{encoder_layer_forward.4} parent=1 // loop_header
      %s18 = sphi 0, %s22
      %p19 = scmp.ge.s32.totalorder %s18, 4
      %s28 = sphi 0, %s30
      %s31 = sphi 0, %s28
      %s32 = sphi 0, %s31
      %s48 = sphi 0, %s32
      %s54 = sphi 0, %s56
      %s57 = sphi 0, %s54
      %s58 = sphi 0, %s57
      %s74 = sphi 0, %s58
      %s80 = sphi 0, %s82
      %s83 = sphi 0, %s80
      %s84 = sphi 0, %s83
      %s100 = sphi 0, %s84
    $region4: #{encoder_layer_forward.4} parent=1 // loop_header_branch
      %21 = sbr.rel (%p19) target = $region8
    $region5: #{encoder_layer_forward.4} parent=1 // loop_body
      %s23 = ssub.s32 %s18, 1
      %s24 = ssub.s32 %s18, 2
      %s25 = sadd.s32 %s18, 1
      %s26 = ssub.s32 %s18, %s25
      %p27 = scmp.eq.s32.totalorder %s26, 0
      %s29 = sadd.s32 %s28, 1
      %s30 = scalar_select %p27, %s28, %s29
      %p33 = pneg %p27
      %p34 = scmp.eq.s32.totalorder %s18, 1
      %p35 = por %p33, %p34
      %p36 = scmp.ne.s32.totalorder %s28, %s31
      %p37 = scmp.eq.s32.totalorder %s18, 0
      %p38 = por %p36, %p37
      %p39 = scmp.ne.s32.totalorder %s28, %s31
      %p40 = scmp.eq.s32.totalorder %s23, 1
      %p41 = por %p39, %p40
      %p42 = scmp.ne.s32.totalorder %s31, %s32
      %p43 = scmp.eq.s32.totalorder %s23, 0
      %p44 = por %p42, %p43
      %p45 = scmp.ne.s32.totalorder %s31, %s32
      %p46 = scmp.eq.s32.totalorder %s24, 1
      %p47 = por %p45, %p46
      %p49 = scmp.ne.s32.totalorder %s32, %s48
      %p50 = scmp.eq.s32.totalorder %s24, 0
      %p51 = por %p49, %p50
      %s52 = ssub.s32 %s18, %s25
      %p53 = scmp.eq.s32.totalorder %s52, 0
      %s55 = sadd.s32 %s54, 1
      %s56 = scalar_select %p53, %s54, %s55
      %p59 = pneg %p53
      %p60 = scmp.eq.s32.totalorder %s18, 1
      %p61 = por %p59, %p60
      %p62 = scmp.ne.s32.totalorder %s54, %s57
      %p63 = scmp.eq.s32.totalorder %s18, 0
      %p64 = por %p62, %p63
      %p65 = scmp.ne.s32.totalorder %s54, %s57
      %p66 = scmp.eq.s32.totalorder %s23, 1
      %p67 = por %p65, %p66
      %p68 = scmp.ne.s32.totalorder %s57, %s58
      %p69 = scmp.eq.s32.totalorder %s23, 0
      %p70 = por %p68, %p69
      %p71 = scmp.ne.s32.totalorder %s57, %s58
      %p72 = scmp.eq.s32.totalorder %s24, 1
      %p73 = por %p71, %p72
      %p75 = scmp.ne.s32.totalorder %s58, %s74
      %p76 = scmp.eq.s32.totalorder %s24, 0
      %p77 = por %p75, %p76
      %s78 = ssub.s32 %s18, %s25
      %p79 = scmp.eq.s32.totalorder %s78, 0
      %s81 = sadd.s32 %s80, 1
      %s82 = scalar_select %p79, %s80, %s81
      %p85 = pneg %p79
      %p86 = scmp.eq.s32.totalorder %s18, 1
      %p87 = por %p85, %p86
      %p88 = scmp.ne.s32.totalorder %s80, %s83
      %p89 = scmp.eq.s32.totalorder %s18, 0
      %p90 = por %p88, %p89
      %p91 = scmp.ne.s32.totalorder %s80, %s83
      %p92 = scmp.eq.s32.totalorder %s23, 1
      %p93 = por %p91, %p92
      %p94 = scmp.ne.s32.totalorder %s83, %s84
      %p95 = scmp.eq.s32.totalorder %s23, 0
      %p96 = por %p94, %p95
      %p97 = scmp.ne.s32.totalorder %s83, %s84
      %p98 = scmp.eq.s32.totalorder %s24, 1
      %p99 = por %p97, %p98
      %p101 = scmp.ne.s32.totalorder %s84, %s100
      %p102 = scmp.eq.s32.totalorder %s24, 0
      %p103 = por %p101, %p102
      %p104 = scmp.le.s32.totalorder 1, %s18
      %p105 = scmp.lt.s32.totalorder %s18, 3
      %p106 = pnand %p104, %p105
      %p107 = pneg %p106
      // Predicated region
      $region9: #{encoder_layer_forward.4} parent=5 // pred_check
        _
      $region10: #{encoder_layer_forward.4} parent=5 // pred_check_branch
        %109 = sbr.rel (%p106) target = $region12
      $region11: #{encoder_layer_forward.4} parent=5 // pred_region
        %s110 = ssub.s32 %s18, 1
      $region12: #{encoder_layer_forward.4} parent=5 // pred_fallthru
        _
      %p111 = scmp.lt.s32.totalorder %s18, 2
      // Predicated region
      $region13: #{encoder_layer_forward.4} parent=5 // pred_check
        %p112 = pneg %p111
      $region14: #{encoder_layer_forward.4} parent=5 // pred_check_branch
        %114 = sbr.rel (%p112) target = $region16
      $region15: #{encoder_layer_forward.4} parent=5 // pred_region
        // Predicated region
        $region17: #{encoder_layer_forward.4} parent=15 // pred_check
          %p115 = pneg %p38
        $region18: #{encoder_layer_forward.4} parent=15 // pred_check_branch
          %117 = sbr.rel (%p115) target = $region20
        $region19: #{encoder_layer_forward.4} parent=15 // pred_region
          %s118 = sand.u32 %s28, 1
          %s119 = scalar_lea.sflag [#allocation3], %s118
          %s120 = sand.u32 %s28, 1
          %s121 = smul.addr %s120, 4
          %s122 = scalar_lea.vmem [#allocation2], %s121
          %s124 = ssub.s32 64, 64
          %125 = vsyncadd %s119, %s124
          %s126 = smul.addr %s18, 64
          %s127 = scalar_lea.hbm %s0, %s126
          %s129 = sshll.u32 %s122, 4
          %s130 = int_to_ptr.vmem [resolvable:$true] %s129
          %132 = dma.hbm_to_vmem [thread:$0]  %s127, 64, %s130, %s119
        $region20: #{encoder_layer_forward.4} parent=15 // pred_fallthru
          _
      $region16: #{encoder_layer_forward.4} parent=5 // pred_fallthru
        _
      %p133 = scmp.le.s32.totalorder 1, %s18
      %p134 = scmp.lt.s32.totalorder %s18, 3
      %p135 = pnand %p133, %p134
      %p136 = pneg %p135
      // Predicated region
      $region21: #{encoder_layer_forward.4} parent=5 // pred_check
        _
      $region22: #{encoder_layer_forward.4} parent=5 // pred_check_branch
        %138 = sbr.rel (%p135) target = $region24
      $region23: #{encoder_layer_forward.4} parent=5 // pred_region
        %s139 = ssub.s32 %s18, 1
        %s140 = sand.u32 %s31, 1
        %s141 = scalar_lea.sflag [#allocation3], %s140
        %s142 = sand.u32 %s31, 1
        %s143 = smul.addr %s142, 4
        %s144 = scalar_lea.vmem [#allocation2], %s143
        // Predicated region
        $region25: #{encoder_layer_forward.4} parent=23 // pred_check
          %p145 = pneg %p44
        $region26: #{encoder_layer_forward.4} parent=23 // pred_check_branch
          %147 = sbr.rel (%p145) target = $region28
        $region27: #{encoder_layer_forward.4} parent=23 // pred_region
          %148 = dma.done %s141, 64
        $region28: #{encoder_layer_forward.4} parent=23 // pred_fallthru
          _
        %s149 = sand.u32 %s31, 1
        %s150 = scalar_lea.sflag [#allocation3], %s149
        %s151 = sand.u32 %s31, 1
        %s152 = smul.addr %s151, 4
        %s153 = scalar_lea.vmem [#allocation2], %s152
        %p154 = pneg %p44
        %p155 = pneg %p41
        %p156 = pneg %p70
        %p157 = pneg %p67
        %s158 = sand.u32 %s57, 1
        %s159 = scalar_lea.sflag [#allocation4], %s158
        %s160 = sand.u32 %s57, 1
        %s161 = smul.addr %s160, 4
        %s162 = scalar_lea.vmem [#allocation5], %s161
        %p163 = pneg %p96
        %p164 = pneg %p93
        %s165 = sand.u32 %s83, 1
        %s166 = scalar_lea.sflag [#allocation7], %s165
        %s167 = sand.u32 %s83, 1
        %s168 = smul.addr %s167, 16
        %s169 = scalar_lea.vmem [#allocation6], %s168
        %v171 = vld [vmem:[%s144] sm:$0xf]
        %v173 = vunpack.c.l.b16 %v171
        %v174 = vpack.c.b16 %v173, %v173
        %175 = vrot.lane.b32.xlu0 %v174, 96
        %v176 = vpop.permute.xlu0 %175
        %vm177 = vcmask 64512
        %v179 = vsel %vm177, %v171, 0
        %v182 = vsel %vm177, %v176, 0
        %184 = vmatprep.subr.bf16.mxu0 0
        %185 = vmatpush1.bf16.xpose.msra.mxu0 %v182
        %186 = vmatprep.subr.bf16.mxu0 0
        %187 = vmatpush1.bf16.xpose.msra.mxu0 0
        %188 = vmatprep.subr.bf16.mxu0 0
        %189 = vmatpush1.bf16.xpose.msra.mxu0 0
        %190 = vmatprep.subr.bf16.mxu0 0
        %191 = vmatpush1.bf16.xpose.msra.mxu0 0
        %192 = vmatprep.subr.bf16.mxu0 0
        %193 = vmatpush1.bf16.xpose.msra.mxu0 0
        %194 = vmatprep.subr.bf16.mxu0 0
        %195 = vmatpush1.bf16.xpose.msra.mxu0 0
        %196 = vmatprep.subr.bf16.mxu0 0
        %197 = vmatpush1.bf16.xpose.msra.mxu0 0
        %198 = vmatprep.subr.bf16.mxu0 0
        %199 = vmatpush1.bf16.xpose.msra.mxu0 0
        %200 = vmatprep.subr.bf16.mxu0 0
        %201 = vmatpush1.bf16.xpose.msra.mxu0 0
        %202 = vmatprep.subr.bf16.mxu0 0
        %203 = vmatpush1.bf16.xpose.msra.mxu0 0
        %204 = vmatprep.subr.bf16.mxu0 0
        %205 = vmatpush1.bf16.xpose.msra.mxu0 0
        %206 = vmatprep.subr.bf16.mxu0 0
        %207 = vmatpush1.bf16.xpose.msra.mxu0 0
        %208 = vmatprep.subr.bf16.mxu0 0
        %209 = vmatpush1.bf16.xpose.msra.mxu0 0
        %210 = vmatprep.subr.bf16.mxu0 0
        %211 = vmatpush1.bf16.xpose.msra.mxu0 0
        %212 = vmatprep.subr.bf16.mxu0 0
        %213 = vmatpush1.bf16.xpose.msra.mxu0 0
        %214 = vmatprep.subr.bf16.mxu0 0
        %215 = vmatpush1.bf16.xpose.msra.mxu0 0
        %216 = vmatprep.mubr.bf16.mxu0 0
        %217 = vmatmul.mubr.bf16.gmra.mrb[0].mxu0 %v179
        %v218 = vpop.f32.mrb[0].mxu0
        %v219 = vadd.f32 0.0, %v218
        %v220 = vpop.f32.mrb[0].mxu0
        %v221 = vpop.f32.mrb[0].mxu0
        %v222 = vpop.f32.mrb[0].mxu0
        %223 = vdwg.mxu0
        %v224 = vmul.f32 %v219, 0.35355338
        %v225 = vsel %vm177, %v224, -inf
        %226 = vmax.xlane.f32.xlu0 %v225
        %v227 = vpop.xlane.xlu0 %226
        %v228 = vsub.f32 %v224, %v227
        %v229 = vmul.f32 %v228, 1.442695
        %v230 = vpow.pop %v229
        %v231 = vsel %vm177, %v230, 0.0
        %232 = vadd.xlane.f32.xlu0 %v231
        %v233 = vpop.xlane.xlu0 %232
        %v234 = vrcp.pop %v233
        %v235 = vmul.f32 %v230, %v234
        %v236 = vpack.c.bf16 %v235, %v235
        %vm237 = vcmask 60416
        %238 = vst.msk [vmem:[%s169] sm:$0xf] %vm237, %v236
        %239 = vrot.lane.b32.xlu0 %v174, 64
        %v240 = vpop.permute.xlu0 %239
        %v242 = vsel %vm177, %v236, 0
        %vm244 = vcmask 1043456
        %v246 = vsel %vm244, %v240, 0
        %248 = vmatprep.subr.bf16.mxu0 0
        %249 = vmatpush1.bf16.msra.mxu0 %v246
        %250 = vmatprep.subr.bf16.mxu0 0
        %251 = vmatpush1.bf16.msra.mxu0 0
        %252 = vmatprep.subr.bf16.mxu0 0
        %253 = vmatpush1.bf16.msra.mxu0 0
        %254 = vmatprep.subr.bf16.mxu0 0
        %255 = vmatpush1.bf16.msra.mxu0 0
        %256 = vmatprep.subr.bf16.mxu0 0
        %257 = vmatpush1.bf16.msra.mxu0 0
        %258 = vmatprep.subr.bf16.mxu0 0
        %259 = vmatpush1.bf16.msra.mxu0 0
        %260 = vmatprep.subr.bf16.mxu0 0
        %261 = vmatpush1.bf16.msra.mxu0 0
        %262 = vmatprep.subr.bf16.mxu0 0
        %263 = vmatpush1.bf16.msra.mxu0 0
        %264 = vmatprep.subr.bf16.mxu0 0
        %265 = vmatpush1.bf16.msra.mxu0 0
        %266 = vmatprep.subr.bf16.mxu0 0
        %267 = vmatpush1.bf16.msra.mxu0 0
        %268 = vmatprep.subr.bf16.mxu0 0
        %269 = vmatpush1.bf16.msra.mxu0 0
        %270 = vmatprep.subr.bf16.mxu0 0
        %271 = vmatpush1.bf16.msra.mxu0 0
        %272 = vmatprep.subr.bf16.mxu0 0
        %273 = vmatpush1.bf16.msra.mxu0 0
        %274 = vmatprep.subr.bf16.mxu0 0
        %275 = vmatpush1.bf16.msra.mxu0 0
        %276 = vmatprep.subr.bf16.mxu0 0
        %277 = vmatpush1.bf16.msra.mxu0 0
        %278 = vmatprep.subr.bf16.mxu0 0
        %279 = vmatpush1.bf16.msra.mxu0 0
        %280 = vmatprep.mubr.bf16.mxu0 0
        %281 = vmatmul.mubr.bf16.gmra.mrb[0].mxu0 %v242
        %v282 = vpop.f32.mrb[0].mxu0
        %v283 = vadd.f32 0.0, %v282
        %v284 = vpop.f32.mrb[0].mxu0
        %v285 = vpop.f32.mrb[0].mxu0
        %v286 = vpop.f32.mrb[0].mxu0
        %287 = vdwg.mxu0
        %288 = vrot.lane.b32.xlu0 %v174, 120
        %v289 = vpop.permute.xlu0 %288
        %290 = vrot.lane.b32.xlu0 %v174, 88
        %v291 = vpop.permute.xlu0 %290
        %v293 = vsel %vm177, %v289, 0
        %v296 = vsel %vm177, %v291, 0
        %298 = vmatprep.subr.bf16.mxu0 0
        %299 = vmatpush1.bf16.xpose.msra.mxu0 %v296
        %300 = vmatprep.subr.bf16.mxu0 0
        %301 = vmatpush1.bf16.xpose.msra.mxu0 0
        %302 = vmatprep.subr.bf16.mxu0 0
        %303 = vmatpush1.bf16.xpose.msra.mxu0 0
        %304 = vmatprep.subr.bf16.mxu0 0
        %305 = vmatpush1.bf16.xpose.msra.mxu0 0
        %306 = vmatprep.subr.bf16.mxu0 0
        %307 = vmatpush1.bf16.xpose.msra.mxu0 0
        %308 = vmatprep.subr.bf16.mxu0 0
        %309 = vmatpush1.bf16.xpose.msra.mxu0 0
        %310 = vmatprep.subr.bf16.mxu0 0
        %311 = vmatpush1.bf16.xpose.msra.mxu0 0
        %312 = vmatprep.subr.bf16.mxu0 0
        %313 = vmatpush1.bf16.xpose.msra.mxu0 0
        %314 = vmatprep.subr.bf16.mxu0 0
        %315 = vmatpush1.bf16.xpose.msra.mxu0 0
        %316 = vmatprep.subr.bf16.mxu0 0
        %317 = vmatpush1.bf16.xpose.msra.mxu0 0
        %318 = vmatprep.subr.bf16.mxu0 0
        %319 = vmatpush1.bf16.xpose.msra.mxu0 0
        %320 = vmatprep.subr.bf16.mxu0 0
        %321 = vmatpush1.bf16.xpose.msra.mxu0 0
        %322 = vmatprep.subr.bf16.mxu0 0
        %323 = vmatpush1.bf16.xpose.msra.mxu0 0
        %324 = vmatprep.subr.bf16.mxu0 0
        %325 = vmatpush1.bf16.xpose.msra.mxu0 0
        %326 = vmatprep.subr.bf16.mxu0 0
        %327 = vmatpush1.bf16.xpose.msra.mxu0 0
        %328 = vmatprep.subr.bf16.mxu0 0
        %329 = vmatpush1.bf16.xpose.msra.mxu0 0
        %330 = vmatprep.mubr.bf16.mxu0 0
        %331 = vmatmul.mubr.bf16.gmra.mrb[0].mxu0 %v293
        %v332 = vpop.f32.mrb[0].mxu0
        %v333 = vadd.f32 0.0, %v332
        %v334 = vpop.f32.mrb[0].mxu0
        %v335 = vpop.f32.mrb[0].mxu0
        %v336 = vpop.f32.mrb[0].mxu0
        %337 = vdwg.mxu0
        %v338 = vmul.f32 %v333, 0.35355338
        %v339 = vsel %vm177, %v338, -inf
        %340 = vmax.xlane.f32.xlu0 %v339
        %v341 = vpop.xlane.xlu0 %340
        %v342 = vsub.f32 %v338, %v341
        %v343 = vmul.f32 %v342, 1.442695
        %v344 = vpow.pop %v343
        %v345 = vsel %vm177, %v344, 0.0
        %346 = vadd.xlane.f32.xlu0 %v345
        %v347 = vpop.xlane.xlu0 %346
        %v348 = vrcp.pop %v347
        %v349 = vmul.f32 %v344, %v348
        %v350 = vpack.c.bf16 %v349, %v349
        %s351 = scalar_lea.vmem %s169, 4 [#allocation6]
        %352 = vst.msk [vmem:[%s351] sm:$0xf] %vm237, %v350
        %353 = vrot.lane.b32.xlu0 %v174, 56
        %v354 = vpop.permute.xlu0 %353
        %v356 = vsel %vm177, %v350, 0
        %v359 = vsel %vm244, %v354, 0
        %361 = vmatprep.subr.bf16.mxu0 0
        %362 = vmatpush1.bf16.msra.mxu0 %v359
        %363 = vmatprep.subr.bf16.mxu0 0
        %364 = vmatpush1.bf16.msra.mxu0 0
        %365 = vmatprep.subr.bf16.mxu0 0
        %366 = vmatpush1.bf16.msra.mxu0 0
        %367 = vmatprep.subr.bf16.mxu0 0
        %368 = vmatpush1.bf16.msra.mxu0 0
        %369 = vmatprep.subr.bf16.mxu0 0
        %370 = vmatpush1.bf16.msra.mxu0 0
        %371 = vmatprep.subr.bf16.mxu0 0
        %372 = vmatpush1.bf16.msra.mxu0 0
        %373 = vmatprep.subr.bf16.mxu0 0
        %374 = vmatpush1.bf16.msra.mxu0 0
        %375 = vmatprep.subr.bf16.mxu0 0
        %376 = vmatpush1.bf16.msra.mxu0 0
        %377 = vmatprep.subr.bf16.mxu0 0
        %378 = vmatpush1.bf16.msra.mxu0 0
        %379 = vmatprep.subr.bf16.mxu0 0
        %380 = vmatpush1.bf16.msra.mxu0 0
        %381 = vmatprep.subr.bf16.mxu0 0
        %382 = vmatpush1.bf16.msra.mxu0 0
        %383 = vmatprep.subr.bf16.mxu0 0
        %384 = vmatpush1.bf16.msra.mxu0 0
        %385 = vmatprep.subr.bf16.mxu0 0
        %386 = vmatpush1.bf16.msra.mxu0 0
        %387 = vmatprep.subr.bf16.mxu0 0
        %388 = vmatpush1.bf16.msra.mxu0 0
        %389 = vmatprep.subr.bf16.mxu0 0
        %390 = vmatpush1.bf16.msra.mxu0 0
        %391 = vmatprep.subr.bf16.mxu0 0
        %392 = vmatpush1.bf16.msra.mxu0 0
        %393 = vmatprep.mubr.bf16.mxu0 0
        %394 = vmatmul.mubr.bf16.gmra.mrb[0].mxu0 %v356
        %v395 = vpop.f32.mrb[0].mxu0
        %v396 = vadd.f32 0.0, %v395
        %v397 = vpop.f32.mrb[0].mxu0
        %v398 = vpop.f32.mrb[0].mxu0
        %v399 = vpop.f32.mrb[0].mxu0
        %400 = vdwg.mxu0
        %401 = vrot.lane.b32.xlu0 %v174, 112
        %v402 = vpop.permute.xlu0 %401
        %403 = vrot.lane.b32.xlu0 %v174, 80
        %v404 = vpop.permute.xlu0 %403
        %v406 = vsel %vm177, %v402, 0
        %v409 = vsel %vm177, %v404, 0
        %411 = vmatprep.subr.bf16.mxu0 0
        %412 = vmatpush1.bf16.xpose.msra.mxu0 %v409
        %413 = vmatprep.subr.bf16.mxu0 0
        %414 = vmatpush1.bf16.xpose.msra.mxu0 0
        %415 = vmatprep.subr.bf16.mxu0 0
        %416 = vmatpush1.bf16.xpose.msra.mxu0 0
        %417 = vmatprep.subr.bf16.mxu0 0
        %418 = vmatpush1.bf16.xpose.msra.mxu0 0
        %419 = vmatprep.subr.bf16.mxu0 0
        %420 = vmatpush1.bf16.xpose.msra.mxu0 0
        %421 = vmatprep.subr.bf16.mxu0 0
        %422 = vmatpush1.bf16.xpose.msra.mxu0 0
        %423 = vmatprep.subr.bf16.mxu0 0
        %424 = vmatpush1.bf16.xpose.msra.mxu0 0
        %425 = vmatprep.subr.bf16.mxu0 0
        %426 = vmatpush1.bf16.xpose.msra.mxu0 0
        %427 = vmatprep.subr.bf16.mxu0 0
        %428 = vmatpush1.bf16.xpose.msra.mxu0 0
        %429 = vmatprep.subr.bf16.mxu0 0
        %430 = vmatpush1.bf16.xpose.msra.mxu0 0
        %431 = vmatprep.subr.bf16.mxu0 0
        %432 = vmatpush1.bf16.xpose.msra.mxu0 0
        %433 = vmatprep.subr.bf16.mxu0 0
        %434 = vmatpush1.bf16.xpose.msra.mxu0 0
        %435 = vmatprep.subr.bf16.mxu0 0
        %436 = vmatpush1.bf16.xpose.msra.mxu0 0
        %437 = vmatprep.subr.bf16.mxu0 0
        %438 = vmatpush1.bf16.xpose.msra.mxu0 0
        %439 = vmatprep.subr.bf16.mxu0 0
        %440 = vmatpush1.bf16.xpose.msra.mxu0 0
        %441 = vmatprep.subr.bf16.mxu0 0
        %442 = vmatpush1.bf16.xpose.msra.mxu0 0
        %443 = vmatprep.mubr.bf16.mxu0 0
        %444 = vmatmul.mubr.bf16.gmra.mrb[0].mxu0 %v406
        %v445 = vpop.f32.mrb[0].mxu0
        %v446 = vadd.f32 0.0, %v445
        %v447 = vpop.f32.mrb[0].mxu0
        %v448 = vpop.f32.mrb[0].mxu0
        %v449 = vpop.f32.mrb[0].mxu0
        %450 = vdwg.mxu0
        %v451 = vmul.f32 %v446, 0.35355338
        %v452 = vsel %vm177, %v451, -inf
        %453 = vmax.xlane.f32.xlu0 %v452
        %v454 = vpop.xlane.xlu0 %453
        %v455 = vsub.f32 %v451, %v454
        %v456 = vmul.f32 %v455, 1.442695
        %v457 = vpow.pop %v456
        %v458 = vsel %vm177, %v457, 0.0
        %459 = vadd.xlane.f32.xlu0 %v458
        %v460 = vpop.xlane.xlu0 %459
        %v461 = vrcp.pop %v460
        %v462 = vmul.f32 %v457, %v461
        %v463 = vpack.c.bf16 %v462, %v462
        %s464 = scalar_lea.vmem %s169, 8 [#allocation6]
        %465 = vst.msk [vmem:[%s464] sm:$0xf] %vm237, %v463
        %466 = vrot.lane.b32.xlu0 %v174, 48
        %v467 = vpop.permute.xlu0 %466
        %v469 = vsel %vm177, %v463, 0
        %v472 = vsel %vm244, %v467, 0
        %474 = vmatprep.subr.bf16.mxu0 0
        %475 = vmatpush1.bf16.msra.mxu0 %v472
        %476 = vmatprep.subr.bf16.mxu0 0
        %477 = vmatpush1.bf16.msra.mxu0 0
        %478 = vmatprep.subr.bf16.mxu0 0
        %479 = vmatpush1.bf16.msra.mxu0 0
        %480 = vmatprep.subr.bf16.mxu0 0
        %481 = vmatpush1.bf16.msra.mxu0 0
        %482 = vmatprep.subr.bf16.mxu0 0
        %483 = vmatpush1.bf16.msra.mxu0 0
        %484 = vmatprep.subr.bf16.mxu0 0
        %485 = vmatpush1.bf16.msra.mxu0 0
        %486 = vmatprep.subr.bf16.mxu0 0
        %487 = vmatpush1.bf16.msra.mxu0 0
        %488 = vmatprep.subr.bf16.mxu0 0
        %489 = vmatpush1.bf16.msra.mxu0 0
        %490 = vmatprep.subr.bf16.mxu0 0
        %491 = vmatpush1.bf16.msra.mxu0 0
        %492 = vmatprep.subr.bf16.mxu0 0
        %493 = vmatpush1.bf16.msra.mxu0 0
        %494 = vmatprep.subr.bf16.mxu0 0
        %495 = vmatpush1.bf16.msra.mxu0 0
        %496 = vmatprep.subr.bf16.mxu0 0
        %497 = vmatpush1.bf16.msra.mxu0 0
        %498 = vmatprep.subr.bf16.mxu0 0
        %499 = vmatpush1.bf16.msra.mxu0 0
        %500 = vmatprep.subr.bf16.mxu0 0
        %501 = vmatpush1.bf16.msra.mxu0 0
        %502 = vmatprep.subr.bf16.mxu0 0
        %503 = vmatpush1.bf16.msra.mxu0 0
        %504 = vmatprep.subr.bf16.mxu0 0
        %505 = vmatpush1.bf16.msra.mxu0 0
        %506 = vmatprep.mubr.bf16.mxu0 0
        %507 = vmatmul.mubr.bf16.gmra.mrb[0].mxu0 %v469
        %v508 = vpop.f32.mrb[0].mxu0
        %v509 = vadd.f32 0.0, %v508
        %v510 = vpop.f32.mrb[0].mxu0
        %v511 = vpop.f32.mrb[0].mxu0
        %v512 = vpop.f32.mrb[0].mxu0
        %513 = vdwg.mxu0
        %514 = vrot.lane.b32.xlu0 %v174, 104
        %v515 = vpop.permute.xlu0 %514
        %516 = vrot.lane.b32.xlu0 %v174, 72
        %v517 = vpop.permute.xlu0 %516
        %v519 = vsel %vm177, %v515, 0
        %v522 = vsel %vm177, %v517, 0
        %524 = vmatprep.subr.bf16.mxu0 0
        %525 = vmatpush1.bf16.xpose.msra.mxu0 %v522
        %526 = vmatprep.subr.bf16.mxu0 0
        %527 = vmatpush1.bf16.xpose.msra.mxu0 0
        %528 = vmatprep.subr.bf16.mxu0 0
        %529 = vmatpush1.bf16.xpose.msra.mxu0 0
        %530 = vmatprep.subr.bf16.mxu0 0
        %531 = vmatpush1.bf16.xpose.msra.mxu0 0
        %532 = vmatprep.subr.bf16.mxu0 0
        %533 = vmatpush1.bf16.xpose.msra.mxu0 0
        %534 = vmatprep.subr.bf16.mxu0 0
        %535 = vmatpush1.bf16.xpose.msra.mxu0 0
        %536 = vmatprep.subr.bf16.mxu0 0
        %537 = vmatpush1.bf16.xpose.msra.mxu0 0
        %538 = vmatprep.subr.bf16.mxu0 0
        %539 = vmatpush1.bf16.xpose.msra.mxu0 0
        %540 = vmatprep.subr.bf16.mxu0 0
        %541 = vmatpush1.bf16.xpose.msra.mxu0 0
        %542 = vmatprep.subr.bf16.mxu0 0
        %543 = vmatpush1.bf16.xpose.msra.mxu0 0
        %544 = vmatprep.subr.bf16.mxu0 0
        %545 = vmatpush1.bf16.xpose.msra.mxu0 0
        %546 = vmatprep.subr.bf16.mxu0 0
        %547 = vmatpush1.bf16.xpose.msra.mxu0 0
        %548 = vmatprep.subr.bf16.mxu0 0
        %549 = vmatpush1.bf16.xpose.msra.mxu0 0
        %550 = vmatprep.subr.bf16.mxu0 0
        %551 = vmatpush1.bf16.xpose.msra.mxu0 0
        %552 = vmatprep.subr.bf16.mxu0 0
        %553 = vmatpush1.bf16.xpose.msra.mxu0 0
        %554 = vmatprep.subr.bf16.mxu0 0
        %555 = vmatpush1.bf16.xpose.msra.mxu0 0
        %556 = vmatprep.mubr.bf16.mxu0 0
        %557 = vmatmul.mubr.bf16.gmra.mrb[0].mxu0 %v519
        %v558 = vpop.f32.mrb[0].mxu0
        %v559 = vadd.f32 0.0, %v558
        %v560 = vpop.f32.mrb[0].mxu0
        %v561 = vpop.f32.mrb[0].mxu0
        %v562 = vpop.f32.mrb[0].mxu0
        %563 = vdwg.mxu0
        %v564 = vmul.f32 %v559, 0.35355338
        %v565 = vsel %vm177, %v564, -inf
        %566 = vmax.xlane.f32.xlu0 %v565
        %v567 = vpop.xlane.xlu0 %566
        %v568 = vsub.f32 %v564, %v567
        %v569 = vmul.f32 %v568, 1.442695
        %v570 = vpow.pop %v569
        %v571 = vsel %vm177, %v570, 0.0
        %572 = vadd.xlane.f32.xlu0 %v571
        %v573 = vpop.xlane.xlu0 %572
        %v574 = vrcp.pop %v573
        %v575 = vmul.f32 %v570, %v574
        %v576 = vpack.c.bf16 %v575, %v575
        %s577 = scalar_lea.vmem %s169, 12 [#allocation6]
        %578 = vst.msk [vmem:[%s577] sm:$0xf] %vm237, %v576
        %579 = vrot.lane.b32.xlu0 %v174, 40
        %v580 = vpop.permute.xlu0 %579
        %v582 = vsel %vm177, %v576, 0
        %v585 = vsel %vm244, %v580, 0
        %587 = vmatprep.subr.bf16.mxu0 0
        %588 = vmatpush1.bf16.msra.mxu0 %v585
        %589 = vmatprep.subr.bf16.mxu0 0
        %590 = vmatpush1.bf16.msra.mxu0 0
        %591 = vmatprep.subr.bf16.mxu0 0
        %592 = vmatpush1.bf16.msra.mxu0 0
        %593 = vmatprep.subr.bf16.mxu0 0
        %594 = vmatpush1.bf16.msra.mxu0 0
        %595 = vmatprep.subr.bf16.mxu0 0
        %596 = vmatpush1.bf16.msra.mxu0 0
        %597 = vmatprep.subr.bf16.mxu0 0
        %598 = vmatpush1.bf16.msra.mxu0 0
        %599 = vmatprep.subr.bf16.mxu0 0
        %600 = vmatpush1.bf16.msra.mxu0 0
        %601 = vmatprep.subr.bf16.mxu0 0
        %602 = vmatpush1.bf16.msra.mxu0 0
        %603 = vmatprep.subr.bf16.mxu0 0
        %604 = vmatpush1.bf16.msra.mxu0 0
        %605 = vmatprep.subr.bf16.mxu0 0
        %606 = vmatpush1.bf16.msra.mxu0 0
        %607 = vmatprep.subr.bf16.mxu0 0
        %608 = vmatpush1.bf16.msra.mxu0 0
        %609 = vmatprep.subr.bf16.mxu0 0
        %610 = vmatpush1.bf16.msra.mxu0 0
        %611 = vmatprep.subr.bf16.mxu0 0
        %612 = vmatpush1.bf16.msra.mxu0 0
        %613 = vmatprep.subr.bf16.mxu0 0
        %614 = vmatpush1.bf16.msra.mxu0 0
        %615 = vmatprep.subr.bf16.mxu0 0
        %616 = vmatpush1.bf16.msra.mxu0 0
        %617 = vmatprep.subr.bf16.mxu0 0
        %618 = vmatpush1.bf16.msra.mxu0 0
        %619 = vmatprep.mubr.bf16.mxu0 0
        %620 = vmatmul.mubr.bf16.gmra.mrb[0].mxu0 %v582
        %v621 = vpop.f32.mrb[0].mxu0
        %v622 = vadd.f32 0.0, %v621
        %v623 = vpop.f32.mrb[0].mxu0
        %v624 = vpop.f32.mrb[0].mxu0
        %v625 = vpop.f32.mrb[0].mxu0
        %626 = vdwg.mxu0
        %628 = vrot.lane.b32.xlu0 %v396, 8
        %v629 = vpop.permute.xlu0 %628
        %632 = vrot.lane.b32.xlu0 %v509, 16
        %v633 = vpop.permute.xlu0 %632
        %636 = vrot.lane.b32.xlu0 %v622, 24
        %v637 = vpop.permute.xlu0 %636
        %v639 = vsel %vm177, %v283, %v629
        %vm640 = vcmask 130048
        %v641 = vsel %vm640, %v639, %v633
        %vm642 = vcmask 195584
        %v643 = vsel %vm642, %v641, %v637
        %v644 = vpack.c.bf16 %v643, %v643
        %vm645 = vcmask 257024
        %646 = vst.msk [vmem:[%s162] sm:$0xf] %vm645, %v644
        %s647 = sand.u32 %s57, 1
        %s648 = scalar_lea.sflag [#allocation4], %s647
        %s649 = sand.u32 %s57, 1
        %s650 = smul.addr %s649, 4
        %s651 = scalar_lea.vmem [#allocation5], %s650
        %s652 = sand.u32 %s83, 1
        %s653 = scalar_lea.sflag [#allocation7], %s652
        %s654 = sand.u32 %s83, 1
        %s655 = smul.addr %s654, 16
        %s656 = scalar_lea.vmem [#allocation6], %s655
        // Predicated region
        $region29: #{encoder_layer_forward.4} parent=23 // pred_check
          %p657 = pneg %p67
        $region30: #{encoder_layer_forward.4} parent=23 // pred_check_branch
          %659 = sbr.rel (%p657) target = $region32
        $region31: #{encoder_layer_forward.4} parent=23 // pred_region
          %s661 = ssub.s32 64, 64
          %662 = vsyncadd %s648, %s661
          %s663 = smul.addr %s23, 64
          %s664 = scalar_lea.hbm %s1, %s663
          %s666 = sshll.u32 %s651, 4
          %s667 = int_to_ptr.vmem [resolvable:$true] %s666
          %669 = dma.vmem_to_hbm [thread:$0]  %s667, 64, %s664, %s648
        $region32: #{encoder_layer_forward.4} parent=23 // pred_fallthru
          _
        // Predicated region
        $region33: #{encoder_layer_forward.4} parent=23 // pred_check
          %p670 = pneg %p93
        $region34: #{encoder_layer_forward.4} parent=23 // pred_check_branch
          %672 = sbr.rel (%p670) target = $region36
        $region35: #{encoder_layer_forward.4} parent=23 // pred_region
          %s674 = ssub.s32 256, 256
          %675 = vsyncadd %s653, %s674
          %s676 = smul.addr %s23, 4
          %s677 = smul.addr %s676, 64
          %s678 = scalar_lea.hbm %s2, %s677
          %s679 = sshll.u32 %s656, 4
          %s680 = int_to_ptr.vmem [resolvable:$true] %s679
          %685 = dma.vmem_to_hbm [thread:$0]  %s680, 256, %s678, %s653, 64, 64, 4
        $region36: #{encoder_layer_forward.4} parent=23 // pred_fallthru
          _
      $region24: #{encoder_layer_forward.4} parent=5 // pred_fallthru
        _
      %p686 = scmp.le.s32.totalorder 2, %s18
      // Predicated region
      $region37: #{encoder_layer_forward.4} parent=5 // pred_check
        %p687 = pneg %p686
      $region38: #{encoder_layer_forward.4} parent=5 // pred_check_branch
        %689 = sbr.rel (%p687) target = $region40
      $region39: #{encoder_layer_forward.4} parent=5 // pred_region
        %s690 = ssub.s32 %s18, 2
        // Predicated region
        $region41: #{encoder_layer_forward.4} parent=39 // pred_check
          %p691 = pneg %p73
        $region42: #{encoder_layer_forward.4} parent=39 // pred_check_branch
          %693 = sbr.rel (%p691) target = $region44
        $region43: #{encoder_layer_forward.4} parent=39 // pred_region
          %s694 = sand.u32 %s58, 1
          %s695 = scalar_lea.sflag [#allocation4], %s694
          %s696 = sand.u32 %s58, 1
          %s697 = smul.addr %s696, 4
          %s698 = scalar_lea.vmem [#allocation5], %s697
          %699 = dma.done %s695, 64
        $region44: #{encoder_layer_forward.4} parent=39 // pred_fallthru
          _
        // Predicated region
        $region45: #{encoder_layer_forward.4} parent=39 // pred_check
          %p700 = pneg %p99
        $region46: #{encoder_layer_forward.4} parent=39 // pred_check_branch
          %702 = sbr.rel (%p700) target = $region48
        $region47: #{encoder_layer_forward.4} parent=39 // pred_region
          %s703 = sand.u32 %s84, 1
          %s704 = scalar_lea.sflag [#allocation7], %s703
          %s705 = sand.u32 %s84, 1
          %s706 = smul.addr %s705, 16
          %s707 = scalar_lea.vmem [#allocation6], %s706
          %708 = dma.done %s704, 256
        $region48: #{encoder_layer_forward.4} parent=39 // pred_fallthru
          _
      $region40: #{encoder_layer_forward.4} parent=5 // pred_fallthru
        _
    $region6: #{encoder_layer_forward.4} parent=1 // loop_footer
      %s22 = sadd.s32 1, %s18
    $region7: #{encoder_layer_forward.4} parent=1 // loop_footer_branch
      %17 = sbr.rel target = $region3
    $region8: #{encoder_layer_forward.4} parent=1 // loop_exit
      _
    %709 = vsyncpa [#allocation3], 1
    %s710 = scalar_lea.sflag [#allocation3], 1
    %711 = vsyncpa %s710, 1
    %712 = vsyncpa [#allocation4], 1
    %s713 = scalar_lea.sflag [#allocation4], 1
    %714 = vsyncpa %s713, 1
    %715 = vsyncpa [#allocation7], 1
    %s716 = scalar_lea.sflag [#allocation7], 1
    %717 = vsyncpa %s716, 1

// kernel: encoder_layer_forward.5
$region0: #{encoder_layer_forward.5}
  #allocation0 [shape = 'u32[]', space=smem, size = 0x4, offset = 0x4, fixed_abs, tag = 'smem constant byte address 0x4 - core index']
  #allocation1 [shape = 'u32[144,128]{1,0:T(1,128)}', space=vmem, size = 0x12000, scoped, tag = 'internal scratch']
  %s0 = inlined_call_operand.hbm [shape: f32[16,32], index: 0, kind: input, shape index: {}]
  %s1 = inlined_call_operand.hbm [shape: bf16[16,32], index: 1, kind: input, shape index: {}]
  %s2 = inlined_call_operand.hbm [shape: bf16[32,32], index: 2, kind: input, shape index: {}]
  %s3 = inlined_call_operand.hbm [shape: f32[1,32], index: 3, kind: input, shape index: {}]
  %s4 = inlined_call_operand.hbm [shape: bf16[32,64], index: 4, kind: input, shape index: {}]
  %s5 = inlined_call_operand.hbm [shape: f32[1,64], index: 5, kind: input, shape index: {}]
  %s6 = inlined_call_operand.hbm [shape: bf16[64,32], index: 6, kind: input, shape index: {}]
  %s7 = inlined_call_operand.hbm [shape: f32[1,32], index: 7, kind: input, shape index: {}]
  %s8 = inlined_call_operand.hbm [shape: f32[1,32], index: 8, kind: input, shape index: {}]
  %s9 = inlined_call_operand.hbm [shape: f32[1,32], index: 9, kind: input, shape index: {}]
  %s10 = inlined_call_operand.hbm [shape: f32[1,32], index: 10, kind: input, shape index: {}]
  %s11 = inlined_call_operand.hbm [shape: f32[1,32], index: 11, kind: input, shape index: {}]
  %s12 = inlined_call_operand.hbm [shape: f32[16,32], index: 12, kind: output, shape index: {}]
  %s13 = sld [smem:[#allocation0]]
  $region106: #{encoder_layer_forward.5} parent=0
    _
  %s15 = ssub.s32 1, %s13
  %s16 = scalar_select 0, %s15, %s13
  $region1: #{encoder_layer_forward.5} parent=0
    #allocation2 [shape = 'u8[8192]{0}', space=vmem, size = 0x2000, scoped, tag = 'input window, operand 0, single buffered']
    #allocation3 [shape = 's32[1]{0}', space=sflag, size = 0x4, scoped, tag = 'scoped memory for encoder_layer_forward.5']
    #allocation4 [shape = 's32[1]{0}', space=sflag, size = 0x4, scoped, tag = 'scoped memory for encoder_layer_forward.5']
    #allocation5 [shape = 'u8[4096]{0}', space=vmem, size = 0x1000, scoped, tag = 'input window, operand 1, single buffered']
    #allocation6 [shape = 's32[1]{0}', space=sflag, size = 0x4, scoped, tag = 'scoped memory for encoder_layer_forward.5']
    #allocation7 [shape = 'u8[8192]{0}', space=vmem, size = 0x2000, scoped, tag = 'input window, operand 2, single buffered']
    #allocation8 [shape = 'u8[512]{0}', space=vmem, size = 0x400, scoped, tag = 'input window, operand 3, single buffered']
    #allocation9 [shape = 's32[1]{0}', space=sflag, size = 0x4, scoped, tag = 'scoped memory for encoder_layer_forward.5']
    #allocation10 [shape = 'u8[8192]{0}', space=vmem, size = 0x2000, scoped, tag = 'input window, operand 4, single buffered']
    #allocation11 [shape = 'u8[512]{0}', space=vmem, size = 0x400, scoped, tag = 'input window, operand 5, single buffered']
    #allocation12 [shape = 's32[1]{0}', space=sflag, size = 0x4, scoped, tag = 'scoped memory for encoder_layer_forward.5']
    #allocation13 [shape = 'u8[16384]{0}', space=vmem, size = 0x4000, scoped, tag = 'input window, operand 6, single buffered']
    #allocation14 [shape = 'u8[512]{0}', space=vmem, size = 0x400, scoped, tag = 'input window, operand 7, single buffered']
    #allocation15 [shape = 's32[1]{0}', space=sflag, size = 0x4, scoped, tag = 'scoped memory for encoder_layer_forward.5']
    #allocation16 [shape = 'u8[512]{0}', space=vmem, size = 0x400, scoped, tag = 'input window, operand 8, single buffered']
    #allocation17 [shape = 'u8[512]{0}', space=vmem, size = 0x400, scoped, tag = 'input window, operand 9, single buffered']
    #allocation18 [shape = 's32[1]{0}', space=sflag, size = 0x4, scoped, tag = 'scoped memory for encoder_layer_forward.5']
    #allocation19 [shape = 'u8[512]{0}', space=vmem, size = 0x400, scoped, tag = 'input window, operand 10, single buffered']
    #allocation20 [shape = 'u8[512]{0}', space=vmem, size = 0x400, scoped, tag = 'input window, operand 11, single buffered']
    #allocation21 [shape = 's32[1]{0}', space=sflag, size = 0x4, scoped, tag = 'scoped memory for encoder_layer_forward.5']
    #allocation22 [shape = 'u8[8192]{0}', space=vmem, size = 0x2000, scoped, tag = 'output window, operand 0, single buffered']
    %17 = vsyncpa [#allocation3], 0
    %18 = vsyncpa [#allocation6], 0
    %19 = vsyncpa [#allocation9], 0
    %20 = vsyncpa [#allocation12], 0
    %21 = vsyncpa [#allocation15], 0
    %22 = vsyncpa [#allocation18], 0
    %23 = vsyncpa [#allocation21], 0
    %24 = vsyncpa [#allocation4], 0
    // Predicated region
    $region2: #{encoder_layer_forward.5} parent=1 // pred_check
      _
    $region3: #{encoder_layer_forward.5} parent=1 // pred_check_branch
      %26 = sbr.rel (0) target = $region5
    $region4: #{encoder_layer_forward.5} parent=1 // pred_region
      %s28 = ssub.s32 256, 256
      %29 = vsyncadd [#allocation3], %s28
      %s30 = sshll.u32 [#allocation2], 4
      %s31 = int_to_ptr.vmem [resolvable:$true] %s30
      %36 = dma.hbm_to_vmem [thread:$0]  %s0, 256, %s31, [#allocation3], 128, 128, 8
    $region5: #{encoder_layer_forward.5} parent=1 // pred_fallthru
      _
    // Predicated region
    $region6: #{encoder_layer_forward.5} parent=1 // pred_check
      _
    $region7: #{encoder_layer_forward.5} parent=1 // pred_check_branch
      %38 = sbr.rel (0) target = $region9
    $region8: #{encoder_layer_forward.5} parent=1 // pred_region
      %s40 = ssub.s32 128, 128
      %41 = vsyncadd [#allocation6], %s40
      %s42 = sshll.u32 [#allocation5], 4
      %s43 = int_to_ptr.vmem [resolvable:$true] %s42
      %48 = dma.hbm_to_vmem [thread:$0]  %s1, 128, %s43, [#allocation6], 64, 64, 4
    $region9: #{encoder_layer_forward.5} parent=1 // pred_fallthru
      _
    // Predicated region
    $region10: #{encoder_layer_forward.5} parent=1 // pred_check
      _
    $region11: #{encoder_layer_forward.5} parent=1 // pred_check_branch
      %50 = sbr.rel (0) target = $region13
    $region12: #{encoder_layer_forward.5} parent=1 // pred_region
      %s52 = ssub.s32 256, 256
      %53 = vsyncadd [#allocation6], %s52
      %s54 = sshll.u32 [#allocation7], 4
      %s55 = int_to_ptr.vmem [resolvable:$true] %s54
      %60 = dma.hbm_to_vmem [thread:$0]  %s2, 256, %s55, [#allocation6], 64, 64, 4
    $region13: #{encoder_layer_forward.5} parent=1 // pred_fallthru
      _
    // Predicated region
    $region14: #{encoder_layer_forward.5} parent=1 // pred_check
      _
    $region15: #{encoder_layer_forward.5} parent=1 // pred_check_branch
      %62 = sbr.rel (0) target = $region17
    $region16: #{encoder_layer_forward.5} parent=1 // pred_region
      %s64 = ssub.s32 16, 16
      %65 = vsyncadd [#allocation9], %s64
      %s67 = sshll.u32 [#allocation8], 4
      %s68 = int_to_ptr.vmem [resolvable:$true] %s67
      %70 = dma.hbm_to_vmem [thread:$0]  %s3, 16, %s68, [#allocation9]
    $region17: #{encoder_layer_forward.5} parent=1 // pred_fallthru
      _
    // Predicated region
    $region18: #{encoder_layer_forward.5} parent=1 // pred_check
      _
    $region19: #{encoder_layer_forward.5} parent=1 // pred_check_branch
      %72 = sbr.rel (0) target = $region21
    $region20: #{encoder_layer_forward.5} parent=1 // pred_region
      %s74 = ssub.s32 256, 256
      %75 = vsyncadd [#allocation9], %s74
      %s76 = sshll.u32 [#allocation10], 4
      %s77 = int_to_ptr.vmem [resolvable:$true] %s76
      %82 = dma.hbm_to_vmem [thread:$0]  %s4, 256, %s77, [#allocation9], 64, 64, 4
    $region21: #{encoder_layer_forward.5} parent=1 // pred_fallthru
      _
    // Predicated region
    $region22: #{encoder_layer_forward.5} parent=1 // pred_check
      _
    $region23: #{encoder_layer_forward.5} parent=1 // pred_check_branch
      %84 = sbr.rel (0) target = $region25
    $region24: #{encoder_layer_forward.5} parent=1 // pred_region
      %s86 = ssub.s32 16, 16
      %87 = vsyncadd [#allocation12], %s86
      %s89 = sshll.u32 [#allocation11], 4
      %s90 = int_to_ptr.vmem [resolvable:$true] %s89
      %92 = dma.hbm_to_vmem [thread:$0]  %s5, 16, %s90, [#allocation12]
    $region25: #{encoder_layer_forward.5} parent=1 // pred_fallthru
      _
    // Predicated region
    $region26: #{encoder_layer_forward.5} parent=1 // pred_check
      _
    $region27: #{encoder_layer_forward.5} parent=1 // pred_check_branch
      %94 = sbr.rel (0) target = $region29
    $region28: #{encoder_layer_forward.5} parent=1 // pred_region
      %s96 = ssub.s32 512, 512
      %97 = vsyncadd [#allocation12], %s96
      %s98 = sshll.u32 [#allocation13], 4
      %s99 = int_to_ptr.vmem [resolvable:$true] %s98
      %104 = dma.hbm_to_vmem [thread:$0]  %s6, 512, %s99, [#allocation12], 64, 64, 4
    $region29: #{encoder_layer_forward.5} parent=1 // pred_fallthru
      _
    // Predicated region
    $region30: #{encoder_layer_forward.5} parent=1 // pred_check
      _
    $region31: #{encoder_layer_forward.5} parent=1 // pred_check_branch
      %106 = sbr.rel (0) target = $region33
    $region32: #{encoder_layer_forward.5} parent=1 // pred_region
      %s108 = ssub.s32 16, 16
      %109 = vsyncadd [#allocation15], %s108
      %s111 = sshll.u32 [#allocation14], 4
      %s112 = int_to_ptr.vmem [resolvable:$true] %s111
      %114 = dma.hbm_to_vmem [thread:$0]  %s7, 16, %s112, [#allocation15]
    $region33: #{encoder_layer_forward.5} parent=1 // pred_fallthru
      _
    // Predicated region
    $region34: #{encoder_layer_forward.5} parent=1 // pred_check
      _
    $region35: #{encoder_layer_forward.5} parent=1 // pred_check_branch
      %116 = sbr.rel (0) target = $region37
    $region36: #{encoder_layer_forward.5} parent=1 // pred_region
      %s118 = ssub.s32 16, 16
      %119 = vsyncadd [#allocation15], %s118
      %s121 = sshll.u32 [#allocation16], 4
      %s122 = int_to_ptr.vmem [resolvable:$true] %s121
      %124 = dma.hbm_to_vmem [thread:$0]  %s8, 16, %s122, [#allocation15]
    $region37: #{encoder_layer_forward.5} parent=1 // pred_fallthru
      _
    // Predicated region
    $region38: #{encoder_layer_forward.5} parent=1 // pred_check
      _
    $region39: #{encoder_layer_forward.5} parent=1 // pred_check_branch
      %126 = sbr.rel (0) target = $region41
    $region40: #{encoder_layer_forward.5} parent=1 // pred_region
      %s128 = ssub.s32 16, 16
      %129 = vsyncadd [#allocation18], %s128
      %s131 = sshll.u32 [#allocation17], 4
      %s132 = int_to_ptr.vmem [resolvable:$true] %s131
      %134 = dma.hbm_to_vmem [thread:$0]  %s9, 16, %s132, [#allocation18]
    $region41: #{encoder_layer_forward.5} parent=1 // pred_fallthru
      _
    // Predicated region
    $region42: #{encoder_layer_forward.5} parent=1 // pred_check
      _
    $region43: #{encoder_layer_forward.5} parent=1 // pred_check_branch
      %136 = sbr.rel (0) target = $region45
    $region44: #{encoder_layer_forward.5} parent=1 // pred_region
      %s138 = ssub.s32 16, 16
      %139 = vsyncadd [#allocation18], %s138
      %s141 = sshll.u32 [#allocation19], 4
      %s142 = int_to_ptr.vmem [resolvable:$true] %s141
      %144 = dma.hbm_to_vmem [thread:$0]  %s10, 16, %s142, [#allocation18]
    $region45: #{encoder_layer_forward.5} parent=1 // pred_fallthru
      _
    // Predicated region
    $region46: #{encoder_layer_forward.5} parent=1 // pred_check
      _
    $region47: #{encoder_layer_forward.5} parent=1 // pred_check_branch
      %146 = sbr.rel (0) target = $region49
    $region48: #{encoder_layer_forward.5} parent=1 // pred_region
      %s148 = ssub.s32 16, 16
      %149 = vsyncadd [#allocation21], %s148
      %s151 = sshll.u32 [#allocation20], 4
      %s152 = int_to_ptr.vmem [resolvable:$true] %s151
      %154 = dma.hbm_to_vmem [thread:$0]  %s11, 16, %s152, [#allocation21]
    $region49: #{encoder_layer_forward.5} parent=1 // pred_fallthru
      _
    // Predicated region
    $region50: #{encoder_layer_forward.5} parent=1 // pred_check
      _
    $region51: #{encoder_layer_forward.5} parent=1 // pred_check_branch
      %156 = sbr.rel (0) target = $region53
    $region52: #{encoder_layer_forward.5} parent=1 // pred_region
      %157 = dma.done [#allocation3], 256
    $region53: #{encoder_layer_forward.5} parent=1 // pred_fallthru
      _
    // Predicated region
    $region54: #{encoder_layer_forward.5} parent=1 // pred_check
      _
    $region55: #{encoder_layer_forward.5} parent=1 // pred_check_branch
      %159 = sbr.rel (0) target = $region57
    $region56: #{encoder_layer_forward.5} parent=1 // pred_region
      %160 = dma.done [#allocation6], 128
    $region57: #{encoder_layer_forward.5} parent=1 // pred_fallthru
      _
    // Predicated region
    $region58: #{encoder_layer_forward.5} parent=1 // pred_check
      _
    $region59: #{encoder_layer_forward.5} parent=1 // pred_check_branch
      %162 = sbr.rel (0) target = $region61
    $region60: #{encoder_layer_forward.5} parent=1 // pred_region
      %163 = dma.done [#allocation6], 256
    $region61: #{encoder_layer_forward.5} parent=1 // pred_fallthru
      _
    // Predicated region
    $region62: #{encoder_layer_forward.5} parent=1 // pred_check
      _
    $region63: #{encoder_layer_forward.5} parent=1 // pred_check_branch
      %165 = sbr.rel (0) target = $region65
    $region64: #{encoder_layer_forward.5} parent=1 // pred_region
      %166 = dma.done [#allocation9], 16
    $region65: #{encoder_layer_forward.5} parent=1 // pred_fallthru
      _
    // Predicated region
    $region66: #{encoder_layer_forward.5} parent=1 // pred_check
      _
    $region67: #{encoder_layer_forward.5} parent=1 // pred_check_branch
      %168 = sbr.rel (0) target = $region69
    $region68: #{encoder_layer_forward.5} parent=1 // pred_region
      %169 = dma.done [#allocation9], 256
    $region69: #{encoder_layer_forward.5} parent=1 // pred_fallthru
      _
    // Predicated region
    $region70: #{encoder_layer_forward.5} parent=1 // pred_check
      _
    $region71: #{encoder_layer_forward.5} parent=1 // pred_check_branch
      %171 = sbr.rel (0) target = $region73
    $region72: #{encoder_layer_forward.5} parent=1 // pred_region
      %172 = dma.done [#allocation12], 16
    $region73: #{encoder_layer_forward.5} parent=1 // pred_fallthru
      _
    // Predicated region
    $region74: #{encoder_layer_forward.5} parent=1 // pred_check
      _
    $region75: #{encoder_layer_forward.5} parent=1 // pred_check_branch
      %174 = sbr.rel (0) target = $region77
    $region76: #{encoder_layer_forward.5} parent=1 // pred_region
      %175 = dma.done [#allocation12], 512
    $region77: #{encoder_layer_forward.5} parent=1 // pred_fallthru
      _
    // Predicated region
    $region78: #{encoder_layer_forward.5} parent=1 // pred_check
      _
    $region79: #{encoder_layer_forward.5} parent=1 // pred_check_branch
      %177 = sbr.rel (0) target = $region81
    $region80: #{encoder_layer_forward.5} parent=1 // pred_region
      %178 = dma.done [#allocation15], 16
    $region81: #{encoder_layer_forward.5} parent=1 // pred_fallthru
      _
    // Predicated region
    $region82: #{encoder_layer_forward.5} parent=1 // pred_check
      _
    $region83: #{encoder_layer_forward.5} parent=1 // pred_check_branch
      %180 = sbr.rel (0) target = $region85
    $region84: #{encoder_layer_forward.5} parent=1 // pred_region
      %181 = dma.done [#allocation15], 16
    $region85: #{encoder_layer_forward.5} parent=1 // pred_fallthru
      _
    // Predicated region
    $region86: #{encoder_layer_forward.5} parent=1 // pred_check
      _
    $region87: #{encoder_layer_forward.5} parent=1 // pred_check_branch
      %183 = sbr.rel (0) target = $region89
    $region88: #{encoder_layer_forward.5} parent=1 // pred_region
      %184 = dma.done [#allocation18], 16
    $region89: #{encoder_layer_forward.5} parent=1 // pred_fallthru
      _
    // Predicated region
    $region90: #{encoder_layer_forward.5} parent=1 // pred_check
      _
    $region91: #{encoder_layer_forward.5} parent=1 // pred_check_branch
      %186 = sbr.rel (0) target = $region93
    $region92: #{encoder_layer_forward.5} parent=1 // pred_region
      %187 = dma.done [#allocation18], 16
    $region93: #{encoder_layer_forward.5} parent=1 // pred_fallthru
      _
    // Predicated region
    $region94: #{encoder_layer_forward.5} parent=1 // pred_check
      _
    $region95: #{encoder_layer_forward.5} parent=1 // pred_check_branch
      %189 = sbr.rel (0) target = $region97
    $region96: #{encoder_layer_forward.5} parent=1 // pred_region
      %190 = dma.done [#allocation21], 16
    $region97: #{encoder_layer_forward.5} parent=1 // pred_fallthru
      _
    %v192 = vld [vmem:[#allocation2] sm:$0xff]
    %v193 = vld [vmem:[#allocation2 + $0x8] sm:$0xff]
    %v194 = vld [vmem:[#allocation5] sm:$0xf]
    %v195 = vld [vmem:[#allocation5 + $0x4] sm:$0xf]
    %v196 = vld [vmem:[#allocation7] sm:$0xf]
    %v197 = vld [vmem:[#allocation7 + $0x4] sm:$0xf]
    %v198 = vld [vmem:[#allocation7 + $0x8] sm:$0xf]
    %v199 = vld [vmem:[#allocation7 + $0xc] sm:$0xf]
    %v200 = vld [vmem:[#allocation8] sm:$0x1]
    %v202 = vlaneseq
    %v203 = vshrl.u32 %v202, 7
    %v204 = vsub.s32 0, %v203
    %v205 = vrot.slane %v200, %v204
    %v209 = vunpack.c.l.b16 %v194
    %v210 = vunpack.c.l.b16 %v195
    %v211 = vpack.c.b16 %v210, %v209
    %v216 = vunpack.c.l.b16 %v196
    %v217 = vunpack.c.l.b16 %v197
    %v218 = vunpack.c.l.b16 %v198
    %v219 = vunpack.c.l.b16 %v199
    %v220 = vpack.c.b16 %v217, %v216
    %v221 = vpack.c.b16 %v219, %v218
    %vm224 = vcmask 261120
    %v226 = vsel %vm224, %v211, 0
    %228 = vmatprep.subr.bf16.mxu0 0
    %229 = vmatpush1.bf16.msra.mxu0 %v220
    %230 = vmatprep.subr.bf16.mxu0 0
    %231 = vmatpush1.bf16.msra.mxu0 %v221
    %232 = vmatprep.subr.bf16.mxu0 0
    %233 = vmatpush1.bf16.msra.mxu0 0
    %234 = vmatprep.subr.bf16.mxu0 0
    %235 = vmatpush1.bf16.msra.mxu0 0
    %236 = vmatprep.subr.bf16.mxu0 0
    %237 = vmatpush1.bf16.msra.mxu0 0
    %238 = vmatprep.subr.bf16.mxu0 0
    %239 = vmatpush1.bf16.msra.mxu0 0
    %240 = vmatprep.subr.bf16.mxu0 0
    %241 = vmatpush1.bf16.msra.mxu0 0
    %242 = vmatprep.subr.bf16.mxu0 0
    %243 = vmatpush1.bf16.msra.mxu0 0
    %244 = vmatprep.subr.bf16.mxu0 0
    %245 = vmatpush1.bf16.msra.mxu0 0
    %246 = vmatprep.subr.bf16.mxu0 0
    %247 = vmatpush1.bf16.msra.mxu0 0
    %248 = vmatprep.subr.bf16.mxu0 0
    %249 = vmatpush1.bf16.msra.mxu0 0
    %250 = vmatprep.subr.bf16.mxu0 0
    %251 = vmatpush1.bf16.msra.mxu0 0
    %252 = vmatprep.subr.bf16.mxu0 0
    %253 = vmatpush1.bf16.msra.mxu0 0
    %254 = vmatprep.subr.bf16.mxu0 0
    %255 = vmatpush1.bf16.msra.mxu0 0
    %256 = vmatprep.subr.bf16.mxu0 0
    %257 = vmatpush1.bf16.msra.mxu0 0
    %258 = vmatprep.subr.bf16.mxu0 0
    %259 = vmatpush1.bf16.msra.mxu0 0
    %260 = vmatprep.mubr.bf16.mxu0 0
    %261 = vmatmul.mubr.bf16.gmra.mrb[0].mxu0 %v226
    %v262 = vpop.f32.mrb[0].mxu0
    %v263 = vadd.f32 %v205, %v262
    %v264 = vpop.f32.mrb[0].mxu0
    %v265 = vpop.f32.mrb[0].mxu0
    %v266 = vadd.f32 %v205, %v265
    %v267 = vpop.f32.mrb[0].mxu0
    %268 = vdwg.mxu0
    %v269 = vadd.f32 %v192, %v263
    %v270 = vadd.f32 %v193, %v266
    %v271 = vld [vmem:[#allocation16] sm:$0x1]
    %v272 = vld [vmem:[#allocation17] sm:$0x1]
    %v273 = vsel %vm224, %v269, 0.0
    %274 = vadd.xlane.f32.xlu0 %v273
    %v275 = vpop.xlane.xlu0 %274
    %v276 = vsel %vm224, %v270, 0.0
    %277 = vadd.xlane.f32.xlu0 %v276
    %v278 = vpop.xlane.xlu0 %277
    %v279 = vrcp.pop 32.0
    %v280 = vmul.f32 %v275, %v279
    %v281 = vmul.f32 %v278, %v279
    %v282 = vsub.f32 %v269, %v280
    %v283 = vsub.f32 %v270, %v281
    %v284 = vmul.f32 %v282, %v282
    %v285 = vmul.f32 %v283, %v283
    %v286 = vsel %vm224, %v284, 0.0
    %287 = vadd.xlane.f32.xlu0 %v286
    %v288 = vpop.xlane.xlu0 %287
    %v289 = vsel %vm224, %v285, 0.0
    %290 = vadd.xlane.f32.xlu0 %v289
    %v291 = vpop.xlane.xlu0 %290
    %v292 = vmul.f32 %v288, %v279
    %v293 = vmul.f32 %v291, %v279
    %v294 = vadd.f32 %v292, 1e-05
    %v295 = vadd.f32 %v293, 1e-05
    %v296 = vrsqrt.pop %v294
    %v297 = vrsqrt.pop %v295
    %v298 = vmul.f32 %v282, %v296
    %v299 = vmul.f32 %v283, %v297
    %v301 = vlaneseq
    %v302 = vshrl.u32 %v301, 7
    %v303 = vsub.s32 0, %v302
    %v304 = vrot.slane %v271, %v303
    %v306 = vmul.f32 %v298, %v304
    %v307 = vmul.f32 %v299, %v304
    %v309 = vlaneseq
    %v310 = vshrl.u32 %v309, 7
    %v311 = vsub.s32 0, %v310
    %v312 = vrot.slane %v272, %v311
    %v314 = vadd.f32 %v306, %v312
    %v315 = vadd.f32 %v307, %v312
    %v316 = vpack.c.bf16 %v315, %v314
    %v317 = vld [vmem:[#allocation10] sm:$0xf]
    %v318 = vld [vmem:[#allocation10 + $0x4] sm:$0xf]
    %v319 = vld [vmem:[#allocation10 + $0x8] sm:$0xf]
    %v320 = vld [vmem:[#allocation10 + $0xc] sm:$0xf]
    %v321 = vld [vmem:[#allocation11] sm:$0x1]
    %v323 = vlaneseq
    %v324 = vshrl.u32 %v323, 7
    %v325 = vsub.s32 0, %v324
    %v326 = vrot.slane %v321, %v325
    %v332 = vunpack.c.l.b16 %v317
    %v333 = vunpack.c.l.b16 %v318
    %v334 = vunpack.c.l.b16 %v319
    %v335 = vunpack.c.l.b16 %v320
    %v336 = vpack.c.b16 %v333, %v332
    %v337 = vpack.c.b16 %v335, %v334
    %v341 = vsel %vm224, %v316, 0
    %343 = vmatprep.subr.bf16.mxu0 0
    %344 = vmatpush1.bf16.msra.mxu0 %v336
    %345 = vmatprep.subr.bf16.mxu0 0
    %346 = vmatpush1.bf16.msra.mxu0 %v337
    %347 = vmatprep.subr.bf16.mxu0 0
    %348 = vmatpush1.bf16.msra.mxu0 0
    %349 = vmatprep.subr.bf16.mxu0 0
    %350 = vmatpush1.bf16.msra.mxu0 0
    %351 = vmatprep.subr.bf16.mxu0 0
    %352 = vmatpush1.bf16.msra.mxu0 0
    %353 = vmatprep.subr.bf16.mxu0 0
    %354 = vmatpush1.bf16.msra.mxu0 0
    %355 = vmatprep.subr.bf16.mxu0 0
    %356 = vmatpush1.bf16.msra.mxu0 0
    %357 = vmatprep.subr.bf16.mxu0 0
    %358 = vmatpush1.bf16.msra.mxu0 0
    %359 = vmatprep.subr.bf16.mxu0 0
    %360 = vmatpush1.bf16.msra.mxu0 0
    %361 = vmatprep.subr.bf16.mxu0 0
    %362 = vmatpush1.bf16.msra.mxu0 0
    %363 = vmatprep.subr.bf16.mxu0 0
    %364 = vmatpush1.bf16.msra.mxu0 0
    %365 = vmatprep.subr.bf16.mxu0 0
    %366 = vmatpush1.bf16.msra.mxu0 0
    %367 = vmatprep.subr.bf16.mxu0 0
    %368 = vmatpush1.bf16.msra.mxu0 0
    %369 = vmatprep.subr.bf16.mxu0 0
    %370 = vmatpush1.bf16.msra.mxu0 0
    %371 = vmatprep.subr.bf16.mxu0 0
    %372 = vmatpush1.bf16.msra.mxu0 0
    %373 = vmatprep.subr.bf16.mxu0 0
    %374 = vmatpush1.bf16.msra.mxu0 0
    %375 = vmatprep.mubr.bf16.mxu0 0
    %376 = vmatmul.mubr.bf16.gmra.mrb[0].mxu0 %v341
    %v377 = vpop.f32.mrb[0].mxu0
    %v378 = vadd.f32 %v326, %v377
    %v379 = vpop.f32.mrb[0].mxu0
    %v380 = vpop.f32.mrb[0].mxu0
    %v381 = vadd.f32 %v326, %v380
    %v382 = vpop.f32.mrb[0].mxu0
    %383 = vdwg.mxu0
    %v384 = vmax.f32 %v378, 0.0
    %v385 = vmax.f32 %v381, 0.0
    %v386 = vpack.c.bf16 %v385, %v384
    %v387 = vld [vmem:[#allocation13] sm:$0xf]
    %v388 = vld [vmem:[#allocation13 + $0x4] sm:$0xf]
    %v389 = vld [vmem:[#allocation13 + $0x8] sm:$0xf]
    %v390 = vld [vmem:[#allocation13 + $0xc] sm:$0xf]
    %v391 = vld [vmem:[#allocation13 + $0x10] sm:$0xf]
    %v392 = vld [vmem:[#allocation13 + $0x14] sm:$0xf]
    %v393 = vld [vmem:[#allocation13 + $0x18] sm:$0xf]
    %v394 = vld [vmem:[#allocation13 + $0x1c] sm:$0xf]
    %v395 = vld [vmem:[#allocation14] sm:$0x1]
    %v397 = vlaneseq
    %v398 = vshrl.u32 %v397, 7
    %v399 = vsub.s32 0, %v398
    %v400 = vrot.slane %v395, %v399
    %v410 = vunpack.c.l.b16 %v387
    %v411 = vunpack.c.l.b16 %v388
    %v412 = vunpack.c.l.b16 %v389
    %v413 = vunpack.c.l.b16 %v390
    %v414 = vunpack.c.l.b16 %v391
    %v415 = vunpack.c.l.b16 %v392
    %v416 = vunpack.c.l.b16 %v393
    %v417 = vunpack.c.l.b16 %v394
    %v418 = vpack.c.b16 %v411, %v410
    %v419 = vpack.c.b16 %v413, %v412
    %v420 = vpack.c.b16 %v415, %v414
    %v421 = vpack.c.b16 %v417, %v416
    %vm426 = vcmask 523264
    %v428 = vsel %vm426, %v386, 0
    %430 = vmatprep.subr.bf16.mxu0 0
    %431 = vmatpush1.bf16.msra.mxu0 %v418
    %432 = vmatprep.subr.bf16.mxu0 0
    %433 = vmatpush1.bf16.msra.mxu0 %v419
    %434 = vmatprep.subr.bf16.mxu0 0
    %435 = vmatpush1.bf16.msra.mxu0 %v420
    %436 = vmatprep.subr.bf16.mxu0 0
    %437 = vmatpush1.bf16.msra.mxu0 %v421
    %438 = vmatprep.subr.bf16.mxu0 0
    %439 = vmatpush1.bf16.msra.mxu0 0
    %440 = vmatprep.subr.bf16.mxu0 0
    %441 = vmatpush1.bf16.msra.mxu0 0
    %442 = vmatprep.subr.bf16.mxu0 0
    %443 = vmatpush1.bf16.msra.mxu0 0
    %444 = vmatprep.subr.bf16.mxu0 0
    %445 = vmatpush1.bf16.msra.mxu0 0
    %446 = vmatprep.subr.bf16.mxu0 0
    %447 = vmatpush1.bf16.msra.mxu0 0
    %448 = vmatprep.subr.bf16.mxu0 0
    %449 = vmatpush1.bf16.msra.mxu0 0
    %450 = vmatprep.subr.bf16.mxu0 0
    %451 = vmatpush1.bf16.msra.mxu0 0
    %452 = vmatprep.subr.bf16.mxu0 0
    %453 = vmatpush1.bf16.msra.mxu0 0
    %454 = vmatprep.subr.bf16.mxu0 0
    %455 = vmatpush1.bf16.msra.mxu0 0
    %456 = vmatprep.subr.bf16.mxu0 0
    %457 = vmatpush1.bf16.msra.mxu0 0
    %458 = vmatprep.subr.bf16.mxu0 0
    %459 = vmatpush1.bf16.msra.mxu0 0
    %460 = vmatprep.subr.bf16.mxu0 0
    %461 = vmatpush1.bf16.msra.mxu0 0
    %462 = vmatprep.mubr.bf16.mxu0 0
    %463 = vmatmul.mubr.bf16.gmra.mrb[0].mxu0 %v428
    %v464 = vpop.f32.mrb[0].mxu0
    %v465 = vadd.f32 %v400, %v464
    %v466 = vpop.f32.mrb[0].mxu0
    %v467 = vpop.f32.mrb[0].mxu0
    %v468 = vadd.f32 %v400, %v467
    %v469 = vpop.f32.mrb[0].mxu0
    %470 = vdwg.mxu0
    %v471 = vadd.f32 %v314, %v465
    %v472 = vadd.f32 %v315, %v468
    %v473 = vld [vmem:[#allocation19] sm:$0x1]
    %v474 = vld [vmem:[#allocation20] sm:$0x1]
    %v475 = vsel %vm224, %v471, 0.0
    %476 = vadd.xlane.f32.xlu0 %v475
    %v477 = vpop.xlane.xlu0 %476
    %v478 = vsel %vm224, %v472, 0.0
    %479 = vadd.xlane.f32.xlu0 %v478
    %v480 = vpop.xlane.xlu0 %479
    %v481 = vmul.f32 %v477, %v279
    %v482 = vmul.f32 %v480, %v279
    %v483 = vsub.f32 %v471, %v481
    %v484 = vsub.f32 %v472, %v482
    %v485 = vmul.f32 %v483, %v483
    %v486 = vmul.f32 %v484, %v484
    %v487 = vsel %vm224, %v485, 0.0
    %488 = vadd.xlane.f32.xlu0 %v487
    %v489 = vpop.xlane.xlu0 %488
    %v490 = vsel %vm224, %v486, 0.0
    %491 = vadd.xlane.f32.xlu0 %v490
    %v492 = vpop.xlane.xlu0 %491
    %v493 = vmul.f32 %v489, %v279
    %v494 = vmul.f32 %v492, %v279
    %v495 = vadd.f32 %v493, 1e-05
    %v496 = vadd.f32 %v494, 1e-05
    %v497 = vrsqrt.pop %v495
    %v498 = vrsqrt.pop %v496
    %v499 = vmul.f32 %v483, %v497
    %v500 = vmul.f32 %v484, %v498
    %v502 = vlaneseq
    %v503 = vshrl.u32 %v502, 7
    %v504 = vsub.s32 0, %v503
    %v505 = vrot.slane %v473, %v504
    %v507 = vmul.f32 %v499, %v505
    %v508 = vmul.f32 %v500, %v505
    %v510 = vlaneseq
    %v511 = vshrl.u32 %v510, 7
    %v512 = vsub.s32 0, %v511
    %v513 = vrot.slane %v474, %v512
    %v515 = vadd.f32 %v507, %v513
    %v516 = vadd.f32 %v508, %v513
    %517 = vst.msk [vmem:[#allocation22] sm:$0xff] %vm224, %v515
    %518 = vst.msk [vmem:[#allocation22 + $0x8] sm:$0xff] %vm224, %v516
    // Predicated region
    $region98: #{encoder_layer_forward.5} parent=1 // pred_check
      _
    $region99: #{encoder_layer_forward.5} parent=1 // pred_check_branch
      %520 = sbr.rel (0) target = $region101
    $region100: #{encoder_layer_forward.5} parent=1 // pred_region
      %s522 = ssub.s32 256, 256
      %523 = vsyncadd [#allocation4], %s522
      %s524 = sshll.u32 [#allocation22], 4
      %s525 = int_to_ptr.vmem [resolvable:$true] %s524
      %530 = dma.vmem_to_hbm [thread:$0]  %s525, 256, %s12, [#allocation4], 128, 128, 8
    $region101: #{encoder_layer_forward.5} parent=1 // pred_fallthru
      _
    // Predicated region
    $region102: #{encoder_layer_forward.5} parent=1 // pred_check
      _
    $region103: #{encoder_layer_forward.5} parent=1 // pred_check_branch
      %532 = sbr.rel (0) target = $region105
    $region104: #{encoder_layer_forward.5} parent=1 // pred_region
      %533 = dma.done [#allocation4], 256
    $region105: #{encoder_layer_forward.5} parent=1 // pred_fallthru
      _
    %534 = vsyncpa [#allocation3], 1
    %535 = vsyncpa [#allocation6], 1
    %536 = vsyncpa [#allocation9], 1
    %537 = vsyncpa [#allocation12], 1
    %538 = vsyncpa [#allocation15], 1
    %539 = vsyncpa [#allocation18], 1
    %540 = vsyncpa [#allocation21], 1
    %541 = vsyncpa [#allocation4], 1

</llo_original>
